<compile_context>
chip_gen: v7x
topology: tpu7x:2x2x1
jax: 0.10.0
libtpu: 0.0.40
codegen_flags: <defaults>
</compile_context>

<pallas_src>
import jax
import jax.numpy as jnp
from jax import lax
from jax.experimental import pallas as pl
from jax.experimental.pallas import tpu as pltpu


def text_encoder_kernel(tok_ref, emb_ref, wih_ref, whh_ref, b_ref,
                        wfc_ref, bfc_ref, out_ref, x_ref, gx_ref):
    TB, Hp = out_ref.shape              # batch tile, padded hidden size
    rows = x_ref.shape[0]               # T * TB
    T = rows // TB
    Bp = tok_ref.shape[0] // T          # padded total batch
    bi = pl.program_id(0)

    # 1) Embedding gather: token ids live in SMEM; rows are pulled from the
    #    VMEM embedding table with dynamic sublane loads and written back as
    #    sublane-aligned (TB, Ep) blocks.
    def gather_step(t, carry):
        base = t * Bp + bi * TB
        rows_t = [emb_ref[pl.ds(tok_ref[base + bb], 1), :] for bb in range(TB)]
        t0 = pl.multiple_of(t * TB, TB)
        x_ref[pl.ds(t0, TB), :] = jnp.concatenate(rows_t, axis=0)
        return carry

    lax.fori_loop(0, T, gather_step, 0)

    # 2) Hoisted input projection: one large MXU matmul for the whole sequence.
    gx_ref[...] = (jnp.dot(x_ref[...], wih_ref[...],
                           preferred_element_type=jnp.float32) + b_ref[...])

    # 3) LSTM recurrence (PyTorch gate order i, f, g, o; h0 = c0 = 0).
    #    One (TB, Hp) x (Hp, 4Hp) matmul per step; h/c state stays in vregs.
    whh = whh_ref[...]

    def step(t, carry):
        h, c = carry
        t0 = pl.multiple_of(t * TB, TB)
        gates = gx_ref[pl.ds(t0, TB), :] + jnp.dot(
            h, whh, preferred_element_type=jnp.float32)
        i_g = jax.nn.sigmoid(gates[:, 0 * Hp:1 * Hp])
        f_g = jax.nn.sigmoid(gates[:, 1 * Hp:2 * Hp])
        g_g = jnp.tanh(gates[:, 2 * Hp:3 * Hp])
        o_g = jax.nn.sigmoid(gates[:, 3 * Hp:4 * Hp])
        c_new = f_g * c + i_g * g_g
        h_new = o_g * jnp.tanh(c_new)
        return h_new, c_new

    h0 = jnp.zeros((TB, Hp), jnp.float32)
    c0 = jnp.zeros((TB, Hp), jnp.float32)
    h_T, _ = lax.fori_loop(0, T, step, (h0, c0), unroll=True)

    # 4) Final linear layer; output slab is lane-dense (Hp multiple of 128).
    out_ref[...] = (jnp.dot(h_T, wfc_ref[...],
                            preferred_element_type=jnp.float32) + bfc_ref[...])


def _round_up(n, m):
    return (n + m - 1) // m * m


def _pad_gated(w, n_rows, H, Hp):
    """Place each of the 4 LSTM gate blocks of `w` (.., 4H) at a 128-lane-aligned
    column offset of a zero (n_rows, 4*Hp) array (keeps i,f,g,o ordering)."""
    out = jnp.zeros((n_rows, 4 * Hp), jnp.float32)
    r = w.shape[0]
    for g in range(4):
        out = out.at[:r, g * Hp:g * Hp + H].set(w[:, g * H:(g + 1) * H])
    return out


def text_encoder_forward(tokens_bt, params, *, batch_tile=8):
    """tokens_bt: (B, T) int32 token ids. Returns (B, H) float32 == fc(h_T)."""
    emb, wih, whh, b, wfc, bfc = (params["emb"], params["wih"], params["whh"],
                                  params["b"], params["wfc"], params["bfc"])
    B, T = tokens_bt.shape
    V, E = emb.shape
    H = whh.shape[0]

    TB = batch_tile                     # sublane-aligned batch tile
    Bp = _round_up(B, TB)
    Hp = _round_up(H, 128)              # lane-aligned hidden size
    Ep = _round_up(E, 128)
    Vp = _round_up(V, 8)

    # ---- zero-padded, lane-aligned parameter layouts (zeros keep the padded
    #      h/c lanes exactly 0 through the recurrence) ----
    emb_p = jnp.zeros((Vp, Ep), jnp.float32).at[:V, :E].set(emb)
    wih_p = _pad_gated(wih, Ep, H, Hp)
    whh_p = _pad_gated(whh, Hp, H, Hp)
    b_p = _pad_gated(b, 1, H, Hp)
    wfc_p = jnp.zeros((Hp, Hp), jnp.float32).at[:H, :H].set(wfc)
    bfc_p = jnp.zeros((1, Hp), jnp.float32).at[:, :H].set(bfc)

    # ---- tokens: clamp (OOB ids would be undefined gathers), pad batch,
    #      go time-major, flatten for SMEM ----
    tok = jnp.clip(tokens_bt.astype(jnp.int32), 0, V - 1)
    tok = jnp.zeros((Bp, T), jnp.int32).at[:B, :].set(tok)
    tok_flat = tok.T.reshape(-1)        # (T * Bp,), index = t * Bp + b

    rep = lambda bi, tok_smem: (0, 0)   # weights replicated across batch tiles

    out = pl.pallas_call(
        text_encoder_kernel,
        out_shape=jax.ShapeDtypeStruct((Bp, Hp), jnp.float32),
        grid_spec=pltpu.PrefetchScalarGridSpec(
            num_scalar_prefetch=1,
            grid=(Bp // TB,),
            in_specs=[
                pl.BlockSpec((Vp, Ep), rep),          # embedding table
                pl.BlockSpec((Ep, 4 * Hp), rep),      # W_ih
                pl.BlockSpec((Hp, 4 * Hp), rep),      # W_hh
                pl.BlockSpec((1, 4 * Hp), rep),       # b
                pl.BlockSpec((Hp, Hp), rep),          # W_fc
                pl.BlockSpec((1, Hp), rep),           # b_fc
            ],
            out_specs=pl.BlockSpec((TB, Hp), lambda bi, tok_smem: (bi, 0)),
            scratch_shapes=[
                pltpu.VMEM((T * TB, Ep), jnp.float32),      # gathered embeddings
                pltpu.VMEM((T * TB, 4 * Hp), jnp.float32),  # hoisted gate pre-acts
            ],
        ),
        compiler_params=pltpu.CompilerParams(
            dimension_semantics=("parallel",)),
    )(tok_flat, emb_p, wih_p, whh_p, b_p, wfc_p, bfc_p)

    return out[:B, :H]


def reference_forward(tokens_bt, params):
    """Pure-JAX reference matching torch.nn.{Embedding, LSTM, Linear} semantics."""
    emb, wih, whh, b, wfc, bfc = (params["emb"], params["wih"], params["whh"],
                                  params["b"], params["wfc"], params["bfc"])
    H = whh.shape[0]
    B, T = tokens_bt.shape
    x = emb[tokens_bt]                                              # (B, T, E)
    h = jnp.zeros((B, H), jnp.float32)
    c = jnp.zeros((B, H), jnp.float32)
    for t in range(T):
        gates = x[:, t, :] @ wih + h @ whh + b
        i_g = jax.nn.sigmoid(gates[:, 0 * H:1 * H])
        f_g = jax.nn.sigmoid(gates[:, 1 * H:2 * H])
        g_g = jnp.tanh(gates[:, 2 * H:3 * H])
        o_g = jax.nn.sigmoid(gates[:, 3 * H:4 * H])
        c = f_g * c + i_g * g_g
        h = o_g * jnp.tanh(c)
    return h @ wfc + bfc


def make_params(key, vocab_size, embed_dim, hidden_dim):
    ks = jax.random.split(key, 7)
    scale = 0.1
    return {
        "emb": scale * jax.random.normal(ks[0], (vocab_size, embed_dim), jnp.float32),
        "wih": scale * jax.random.normal(ks[1], (embed_dim, 4 * hidden_dim), jnp.float32),
        "whh": scale * jax.random.normal(ks[2], (hidden_dim, 4 * hidden_dim), jnp.float32),
        "b":   scale * jax.random.normal(ks[3], (1, 4 * hidden_dim), jnp.float32),
        "wfc": scale * jax.random.normal(ks[4], (hidden_dim, hidden_dim), jnp.float32),
        "bfc": scale * jax.random.normal(ks[5], (1, hidden_dim), jnp.float32),
    }


if __name__ == "__main__":
    VOCAB, EMBED, HIDDEN = 32, 16, 32
    B, T = 2, 8

    key = jax.random.PRNGKey(0)
    k_tok, k_par = jax.random.split(key)
    tokens = jax.random.randint(k_tok, (B, T), 0, VOCAB, dtype=jnp.int32)
    params = make_params(k_par, VOCAB, EMBED, HIDDEN)

    out = jax.block_until_ready(text_encoder_forward(tokens, params))
    ref = reference_forward(tokens, params)

    assert out.shape == (B, HIDDEN)
    assert jnp.allclose(out, ref, atol=1e-4, rtol=1e-4), "mismatch vs reference"

    print("KERNEL_OK")
</pallas_src>

<mosaic_0001>
module attributes {stable_mosaic.version = 11 : i64} {
  func.func @text_encoder_kernel(%arg0: i32, %arg1: memref<64xi32, #tpu.memory_space<smem>>, %arg2: memref<32x128xf32, #tpu.memory_space<vmem>>, %arg3: memref<128x512xf32, #tpu.memory_space<vmem>>, %arg4: memref<128x512xf32, #tpu.memory_space<vmem>>, %arg5: memref<1x512xf32, #tpu.memory_space<vmem>>, %arg6: memref<128x128xf32, #tpu.memory_space<vmem>>, %arg7: memref<1x128xf32, #tpu.memory_space<vmem>>, %arg8: memref<8x128xf32, #tpu.memory_space<vmem>>, %arg9: memref<64x128xf32, #tpu.memory_space<vmem>>, %arg10: memref<64x512xf32, #tpu.memory_space<vmem>>) attributes {dimension_semantics = [#tpu.dimension_semantics<parallel>], iteration_bounds = array<i64: 1>, scalar_prefetch = 1 : i64, scratch_operands = 2 : i64, tpu.core_type = #tpu.core_type<tc>, window_params = [{pipeline_mode = #tpu.pipeline_mode<synchronous>, transform_indices = @transform_0, window_bounds = array<i64: 32, 128>}, {pipeline_mode = #tpu.pipeline_mode<synchronous>, transform_indices = @transform_1, window_bounds = array<i64: 128, 512>}, {pipeline_mode = #tpu.pipeline_mode<synchronous>, transform_indices = @transform_2, window_bounds = array<i64: 128, 512>}, {pipeline_mode = #tpu.pipeline_mode<synchronous>, transform_indices = @transform_3, window_bounds = array<i64: 1, 512>}, {pipeline_mode = #tpu.pipeline_mode<synchronous>, transform_indices = @transform_4, window_bounds = array<i64: 128, 128>}, {pipeline_mode = #tpu.pipeline_mode<synchronous>, transform_indices = @transform_5, window_bounds = array<i64: 1, 128>}, {transform_indices = @transform_6, window_bounds = array<i64: 8, 128>}]} {
    %c0_i32 = arith.constant 0 : i32
    %c8_i32 = arith.constant 8 : i32
    %0 = arith.addi %c0_i32, %c8_i32 : i32
    %c1_i32 = arith.constant 1 : i32
    scf.for %arg11 = %c0_i32 to %0 step %c1_i32  : i32 {
      %c8_i32_70 = arith.constant 8 : i32
      %265 = arith.muli %arg11, %c8_i32_70 : i32
      %c8_i32_71 = arith.constant 8 : i32
      %266 = arith.muli %arg0, %c8_i32_71 : i32
      %267 = arith.addi %265, %266 : i32
      %c0_i32_72 = arith.constant 0 : i32
      %268 = arith.addi %267, %c0_i32_72 : i32
      %269 = arith.index_cast %268 : i32 to index
      %270 = memref.load %arg1[%269] : memref<64xi32, #tpu.memory_space<smem>>
      %271 = arith.index_cast %270 : i32 to index
      %c0_73 = arith.constant 0 : index
      %272 = vector.load %arg2[%271, %c0_73] : memref<32x128xf32, #tpu.memory_space<vmem>>, vector<1x128xf32>
      %c1_i32_74 = arith.constant 1 : i32
      %273 = arith.addi %267, %c1_i32_74 : i32
      %274 = arith.index_cast %273 : i32 to index
      %275 = memref.load %arg1[%274] : memref<64xi32, #tpu.memory_space<smem>>
      %276 = arith.index_cast %275 : i32 to index
      %c0_75 = arith.constant 0 : index
      %277 = vector.load %arg2[%276, %c0_75] : memref<32x128xf32, #tpu.memory_space<vmem>>, vector<1x128xf32>
      %c2_i32_76 = arith.constant 2 : i32
      %278 = arith.addi %267, %c2_i32_76 : i32
      %279 = arith.index_cast %278 : i32 to index
      %280 = memref.load %arg1[%279] : memref<64xi32, #tpu.memory_space<smem>>
      %281 = arith.index_cast %280 : i32 to index
      %c0_77 = arith.constant 0 : index
      %282 = vector.load %arg2[%281, %c0_77] : memref<32x128xf32, #tpu.memory_space<vmem>>, vector<1x128xf32>
      %c3_i32_78 = arith.constant 3 : i32
      %283 = arith.addi %267, %c3_i32_78 : i32
      %284 = arith.index_cast %283 : i32 to index
      %285 = memref.load %arg1[%284] : memref<64xi32, #tpu.memory_space<smem>>
      %286 = arith.index_cast %285 : i32 to index
      %c0_79 = arith.constant 0 : index
      %287 = vector.load %arg2[%286, %c0_79] : memref<32x128xf32, #tpu.memory_space<vmem>>, vector<1x128xf32>
      %c4_i32_80 = arith.constant 4 : i32
      %288 = arith.addi %267, %c4_i32_80 : i32
      %289 = arith.index_cast %288 : i32 to index
      %290 = memref.load %arg1[%289] : memref<64xi32, #tpu.memory_space<smem>>
      %291 = arith.index_cast %290 : i32 to index
      %c0_81 = arith.constant 0 : index
      %292 = vector.load %arg2[%291, %c0_81] : memref<32x128xf32, #tpu.memory_space<vmem>>, vector<1x128xf32>
      %c5_i32_82 = arith.constant 5 : i32
      %293 = arith.addi %267, %c5_i32_82 : i32
      %294 = arith.index_cast %293 : i32 to index
      %295 = memref.load %arg1[%294] : memref<64xi32, #tpu.memory_space<smem>>
      %296 = arith.index_cast %295 : i32 to index
      %c0_83 = arith.constant 0 : index
      %297 = vector.load %arg2[%296, %c0_83] : memref<32x128xf32, #tpu.memory_space<vmem>>, vector<1x128xf32>
      %c6_i32_84 = arith.constant 6 : i32
      %298 = arith.addi %267, %c6_i32_84 : i32
      %299 = arith.index_cast %298 : i32 to index
      %300 = memref.load %arg1[%299] : memref<64xi32, #tpu.memory_space<smem>>
      %301 = arith.index_cast %300 : i32 to index
      %c0_85 = arith.constant 0 : index
      %302 = vector.load %arg2[%301, %c0_85] : memref<32x128xf32, #tpu.memory_space<vmem>>, vector<1x128xf32>
      %c7_i32_86 = arith.constant 7 : i32
      %303 = arith.addi %267, %c7_i32_86 : i32
      %304 = arith.index_cast %303 : i32 to index
      %305 = memref.load %arg1[%304] : memref<64xi32, #tpu.memory_space<smem>>
      %306 = arith.index_cast %305 : i32 to index
      %c0_87 = arith.constant 0 : index
      %307 = vector.load %arg2[%306, %c0_87] : memref<32x128xf32, #tpu.memory_space<vmem>>, vector<1x128xf32>
      %c8_i32_88 = arith.constant 8 : i32
      %308 = arith.muli %arg11, %c8_i32_88 : i32
      %309 = tpu.assume_multiple %308, 8 : i32
      %310 = tpu.concatenate %272, %277, %282, %287, %292, %297, %302, %307 in 0 : vector<1x128xf32>, vector<1x128xf32>, vector<1x128xf32>, vector<1x128xf32>, vector<1x128xf32>, vector<1x128xf32>, vector<1x128xf32>, vector<1x128xf32> -> vector<8x128xf32>
      %311 = arith.index_cast %309 : i32 to index
      %c0_89 = arith.constant 0 : index
      %312 = vector.load %arg9[%311, %c0_89] : memref<64x128xf32, #tpu.memory_space<vmem>>, vector<8x128xf32>
      tpu.vector_store %arg9[%311, %c0_89], %310 {strides = array<i32>} : memref<64x128xf32, #tpu.memory_space<vmem>>, vector<8x128xf32>,
    }
    %c8_i32_0 = arith.constant 8 : i32
    %c0 = arith.constant 0 : index
    %c0_1 = arith.constant 0 : index
    %1 = vector.load %arg9[%c0, %c0_1] : memref<64x128xf32, #tpu.memory_space<vmem>>, vector<64x128xf32>
    %c0_2 = arith.constant 0 : index
    %c0_3 = arith.constant 0 : index
    %2 = vector.load %arg3[%c0_2, %c0_3] : memref<128x512xf32, #tpu.memory_space<vmem>>, vector<128x512xf32>
    %cst = arith.constant dense<0.000000e+00> : vector<64x512xf32>
    %3 = tpu.matmul %1, %2, %cst {dimension_numbers = #tpu.dot_dimension_numbers<[1], [0], [0], [1], [0, 0, 1, 1], [], []>} : vector<64x128xf32>, vector<128x512xf32>, vector<64x512xf32> -> vector<64x512xf32>
    %c0_4 = arith.constant 0 : index
    %c0_5 = arith.constant 0 : index
    %4 = vector.load %arg5[%c0_4, %c0_5] : memref<1x512xf32, #tpu.memory_space<vmem>>, vector<1x512xf32>
    %5 = vector.broadcast %4 : vector<1x512xf32> to vector<64x512xf32>
    %6 = arith.addf %3, %5 : vector<64x512xf32>
    %c0_6 = arith.constant 0 : index
    %c0_7 = arith.constant 0 : index
    %7 = vector.load %arg10[%c0_6, %c0_7] : memref<64x512xf32, #tpu.memory_space<vmem>>, vector<64x512xf32>
    tpu.vector_store %arg10[%c0_6, %c0_7], %6 {strides = array<i32>} : memref<64x512xf32, #tpu.memory_space<vmem>>, vector<64x512xf32>,
    %c0_8 = arith.constant 0 : index
    %c0_9 = arith.constant 0 : index
    %8 = vector.load %arg4[%c0_8, %c0_9] : memref<128x512xf32, #tpu.memory_space<vmem>>, vector<128x512xf32>
    %cst_10 = arith.constant 0.000000e+00 : f32
    %9 = vector.broadcast %cst_10 : f32 to vector<8x128xf32>
    %cst_11 = arith.constant 0.000000e+00 : f32
    %10 = vector.broadcast %cst_11 : f32 to vector<8x128xf32>
    %c0_i32_12 = arith.constant 0 : i32
    %c8_i32_13 = arith.constant 8 : i32
    %11 = arith.muli %c0_i32_12, %c8_i32_13 : i32
    %12 = tpu.assume_multiple %11, 8 : i32
    %13 = arith.index_cast %12 : i32 to index
    %c0_14 = arith.constant 0 : index
    %14 = vector.load %arg10[%13, %c0_14] : memref<64x512xf32, #tpu.memory_space<vmem>>, vector<8x512xf32>
    %cst_15 = arith.constant dense<0.000000e+00> : vector<8x512xf32>
    %15 = tpu.matmul %9, %8, %cst_15 {dimension_numbers = #tpu.dot_dimension_numbers<[1], [0], [0], [1], [0, 0, 1, 1], [], []>} : vector<8x128xf32>, vector<128x512xf32>, vector<8x512xf32> -> vector<8x512xf32>
    %16 = arith.addf %14, %15 : vector<8x512xf32>
    %17 = vector.extract_strided_slice %16 {offsets = [0, 0], sizes = [8, 128], strides = [1, 1]} : vector<8x512xf32> to vector<8x128xf32>
    %18 = arith.negf %17 : vector<8x128xf32>
    %19 = math.exp %18 : vector<8x128xf32>
    %cst_16 = arith.constant 1.000000e+00 : f32
    %20 = vector.broadcast %cst_16 : f32 to vector<8x128xf32>
    %21 = arith.addf %20, %19 : vector<8x128xf32>
    %22 = arith.divf %20, %21 : vector<8x128xf32>
    %23 = vector.extract_strided_slice %16 {offsets = [0, 128], sizes = [8, 128], strides = [1, 1]} : vector<8x512xf32> to vector<8x128xf32>
    %24 = arith.negf %23 : vector<8x128xf32>
    %25 = math.exp %24 : vector<8x128xf32>
    %cst_17 = arith.constant 1.000000e+00 : f32
    %26 = vector.broadcast %cst_17 : f32 to vector<8x128xf32>
    %27 = arith.addf %26, %25 : vector<8x128xf32>
    %28 = arith.divf %26, %27 : vector<8x128xf32>
    %29 = vector.extract_strided_slice %16 {offsets = [0, 256], sizes = [8, 128], strides = [1, 1]} : vector<8x512xf32> to vector<8x128xf32>
    %30 = math.tanh %29 : vector<8x128xf32>
    %31 = vector.extract_strided_slice %16 {offsets = [0, 384], sizes = [8, 128], strides = [1, 1]} : vector<8x512xf32> to vector<8x128xf32>
    %32 = arith.negf %31 : vector<8x128xf32>
    %33 = math.exp %32 : vector<8x128xf32>
    %cst_18 = arith.constant 1.000000e+00 : f32
    %34 = vector.broadcast %cst_18 : f32 to vector<8x128xf32>
    %35 = arith.addf %34, %33 : vector<8x128xf32>
    %36 = arith.divf %34, %35 : vector<8x128xf32>
    %37 = arith.mulf %28, %10 : vector<8x128xf32>
    %38 = arith.mulf %22, %30 : vector<8x128xf32>
    %39 = arith.addf %37, %38 : vector<8x128xf32>
    %40 = math.tanh %39 : vector<8x128xf32>
    %41 = arith.mulf %36, %40 : vector<8x128xf32>
    %c1_i32_19 = arith.constant 1 : i32
    %c8_i32_20 = arith.constant 8 : i32
    %42 = arith.muli %c1_i32_19, %c8_i32_20 : i32
    %43 = tpu.assume_multiple %42, 8 : i32
    %44 = arith.index_cast %43 : i32 to index
    %c0_21 = arith.constant 0 : index
    %45 = vector.load %arg10[%44, %c0_21] : memref<64x512xf32, #tpu.memory_space<vmem>>, vector<8x512xf32>
    %cst_22 = arith.constant dense<0.000000e+00> : vector<8x512xf32>
    %46 = tpu.matmul %41, %8, %cst_22 {dimension_numbers = #tpu.dot_dimension_numbers<[1], [0], [0], [1], [0, 0, 1, 1], [], []>} : vector<8x128xf32>, vector<128x512xf32>, vector<8x512xf32> -> vector<8x512xf32>
    %47 = arith.addf %45, %46 : vector<8x512xf32>
    %48 = vector.extract_strided_slice %47 {offsets = [0, 0], sizes = [8, 128], strides = [1, 1]} : vector<8x512xf32> to vector<8x128xf32>
    %49 = arith.negf %48 : vector<8x128xf32>
    %50 = math.exp %49 : vector<8x128xf32>
    %cst_23 = arith.constant 1.000000e+00 : f32
    %51 = vector.broadcast %cst_23 : f32 to vector<8x128xf32>
    %52 = arith.addf %51, %50 : vector<8x128xf32>
    %53 = arith.divf %51, %52 : vector<8x128xf32>
    %54 = vector.extract_strided_slice %47 {offsets = [0, 128], sizes = [8, 128], strides = [1, 1]} : vector<8x512xf32> to vector<8x128xf32>
    %55 = arith.negf %54 : vector<8x128xf32>
    %56 = math.exp %55 : vector<8x128xf32>
    %cst_24 = arith.constant 1.000000e+00 : f32
    %57 = vector.broadcast %cst_24 : f32 to vector<8x128xf32>
    %58 = arith.addf %57, %56 : vector<8x128xf32>
    %59 = arith.divf %57, %58 : vector<8x128xf32>
    %60 = vector.extract_strided_slice %47 {offsets = [0, 256], sizes = [8, 128], strides = [1, 1]} : vector<8x512xf32> to vector<8x128xf32>
    %61 = math.tanh %60 : vector<8x128xf32>
    %62 = vector.extract_strided_slice %47 {offsets = [0, 384], sizes = [8, 128], strides = [1, 1]} : vector<8x512xf32> to vector<8x128xf32>
    %63 = arith.negf %62 : vector<8x128xf32>
    %64 = math.exp %63 : vector<8x128xf32>
    %cst_25 = arith.constant 1.000000e+00 : f32
    %65 = vector.broadcast %cst_25 : f32 to vector<8x128xf32>
    %66 = arith.addf %65, %64 : vector<8x128xf32>
    %67 = arith.divf %65, %66 : vector<8x128xf32>
    %68 = arith.mulf %59, %39 : vector<8x128xf32>
    %69 = arith.mulf %53, %61 : vector<8x128xf32>
    %70 = arith.addf %68, %69 : vector<8x128xf32>
    %71 = math.tanh %70 : vector<8x128xf32>
    %72 = arith.mulf %67, %71 : vector<8x128xf32>
    %c2_i32 = arith.constant 2 : i32
    %c8_i32_26 = arith.constant 8 : i32
    %73 = arith.muli %c2_i32, %c8_i32_26 : i32
    %74 = tpu.assume_multiple %73, 8 : i32
    %75 = arith.index_cast %74 : i32 to index
    %c0_27 = arith.constant 0 : index
    %76 = vector.load %arg10[%75, %c0_27] : memref<64x512xf32, #tpu.memory_space<vmem>>, vector<8x512xf32>
    %cst_28 = arith.constant dense<0.000000e+00> : vector<8x512xf32>
    %77 = tpu.matmul %72, %8, %cst_28 {dimension_numbers = #tpu.dot_dimension_numbers<[1], [0], [0], [1], [0, 0, 1, 1], [], []>} : vector<8x128xf32>, vector<128x512xf32>, vector<8x512xf32> -> vector<8x512xf32>
    %78 = arith.addf %76, %77 : vector<8x512xf32>
    %79 = vector.extract_strided_slice %78 {offsets = [0, 0], sizes = [8, 128], strides = [1, 1]} : vector<8x512xf32> to vector<8x128xf32>
    %80 = arith.negf %79 : vector<8x128xf32>
    %81 = math.exp %80 : vector<8x128xf32>
    %cst_29 = arith.constant 1.000000e+00 : f32
    %82 = vector.broadcast %cst_29 : f32 to vector<8x128xf32>
    %83 = arith.addf %82, %81 : vector<8x128xf32>
    %84 = arith.divf %82, %83 : vector<8x128xf32>
    %85 = vector.extract_strided_slice %78 {offsets = [0, 128], sizes = [8, 128], strides = [1, 1]} : vector<8x512xf32> to vector<8x128xf32>
    %86 = arith.negf %85 : vector<8x128xf32>
    %87 = math.exp %86 : vector<8x128xf32>
    %cst_30 = arith.constant 1.000000e+00 : f32
    %88 = vector.broadcast %cst_30 : f32 to vector<8x128xf32>
    %89 = arith.addf %88, %87 : vector<8x128xf32>
    %90 = arith.divf %88, %89 : vector<8x128xf32>
    %91 = vector.extract_strided_slice %78 {offsets = [0, 256], sizes = [8, 128], strides = [1, 1]} : vector<8x512xf32> to vector<8x128xf32>
    %92 = math.tanh %91 : vector<8x128xf32>
    %93 = vector.extract_strided_slice %78 {offsets = [0, 384], sizes = [8, 128], strides = [1, 1]} : vector<8x512xf32> to vector<8x128xf32>
    %94 = arith.negf %93 : vector<8x128xf32>
    %95 = math.exp %94 : vector<8x128xf32>
    %cst_31 = arith.constant 1.000000e+00 : f32
    %96 = vector.broadcast %cst_31 : f32 to vector<8x128xf32>
    %97 = arith.addf %96, %95 : vector<8x128xf32>
    %98 = arith.divf %96, %97 : vector<8x128xf32>
    %99 = arith.mulf %90, %70 : vector<8x128xf32>
    %100 = arith.mulf %84, %92 : vector<8x128xf32>
    %101 = arith.addf %99, %100 : vector<8x128xf32>
    %102 = math.tanh %101 : vector<8x128xf32>
    %103 = arith.mulf %98, %102 : vector<8x128xf32>
    %c3_i32 = arith.constant 3 : i32
    %c8_i32_32 = arith.constant 8 : i32
    %104 = arith.muli %c3_i32, %c8_i32_32 : i32
    %105 = tpu.assume_multiple %104, 8 : i32
    %106 = arith.index_cast %105 : i32 to index
    %c0_33 = arith.constant 0 : index
    %107 = vector.load %arg10[%106, %c0_33] : memref<64x512xf32, #tpu.memory_space<vmem>>, vector<8x512xf32>
    %cst_34 = arith.constant dense<0.000000e+00> : vector<8x512xf32>
    %108 = tpu.matmul %103, %8, %cst_34 {dimension_numbers = #tpu.dot_dimension_numbers<[1], [0], [0], [1], [0, 0, 1, 1], [], []>} : vector<8x128xf32>, vector<128x512xf32>, vector<8x512xf32> -> vector<8x512xf32>
    %109 = arith.addf %107, %108 : vector<8x512xf32>
    %110 = vector.extract_strided_slice %109 {offsets = [0, 0], sizes = [8, 128], strides = [1, 1]} : vector<8x512xf32> to vector<8x128xf32>
    %111 = arith.negf %110 : vector<8x128xf32>
    %112 = math.exp %111 : vector<8x128xf32>
    %cst_35 = arith.constant 1.000000e+00 : f32
    %113 = vector.broadcast %cst_35 : f32 to vector<8x128xf32>
    %114 = arith.addf %113, %112 : vector<8x128xf32>
    %115 = arith.divf %113, %114 : vector<8x128xf32>
    %116 = vector.extract_strided_slice %109 {offsets = [0, 128], sizes = [8, 128], strides = [1, 1]} : vector<8x512xf32> to vector<8x128xf32>
    %117 = arith.negf %116 : vector<8x128xf32>
    %118 = math.exp %117 : vector<8x128xf32>
    %cst_36 = arith.constant 1.000000e+00 : f32
    %119 = vector.broadcast %cst_36 : f32 to vector<8x128xf32>
    %120 = arith.addf %119, %118 : vector<8x128xf32>
    %121 = arith.divf %119, %120 : vector<8x128xf32>
    %122 = vector.extract_strided_slice %109 {offsets = [0, 256], sizes = [8, 128], strides = [1, 1]} : vector<8x512xf32> to vector<8x128xf32>
    %123 = math.tanh %122 : vector<8x128xf32>
    %124 = vector.extract_strided_slice %109 {offsets = [0, 384], sizes = [8, 128], strides = [1, 1]} : vector<8x512xf32> to vector<8x128xf32>
    %125 = arith.negf %124 : vector<8x128xf32>
    %126 = math.exp %125 : vector<8x128xf32>
    %cst_37 = arith.constant 1.000000e+00 : f32
    %127 = vector.broadcast %cst_37 : f32 to vector<8x128xf32>
    %128 = arith.addf %127, %126 : vector<8x128xf32>
    %129 = arith.divf %127, %128 : vector<8x128xf32>
    %130 = arith.mulf %121, %101 : vector<8x128xf32>
    %131 = arith.mulf %115, %123 : vector<8x128xf32>
    %132 = arith.addf %130, %131 : vector<8x128xf32>
    %133 = math.tanh %132 : vector<8x128xf32>
    %134 = arith.mulf %129, %133 : vector<8x128xf32>
    %c4_i32 = arith.constant 4 : i32
    %c8_i32_38 = arith.constant 8 : i32
    %135 = arith.muli %c4_i32, %c8_i32_38 : i32
    %136 = tpu.assume_multiple %135, 8 : i32
    %137 = arith.index_cast %136 : i32 to index
    %c0_39 = arith.constant 0 : index
    %138 = vector.load %arg10[%137, %c0_39] : memref<64x512xf32, #tpu.memory_space<vmem>>, vector<8x512xf32>
    %cst_40 = arith.constant dense<0.000000e+00> : vector<8x512xf32>
    %139 = tpu.matmul %134, %8, %cst_40 {dimension_numbers = #tpu.dot_dimension_numbers<[1], [0], [0], [1], [0, 0, 1, 1], [], []>} : vector<8x128xf32>, vector<128x512xf32>, vector<8x512xf32> -> vector<8x512xf32>
    %140 = arith.addf %138, %139 : vector<8x512xf32>
    %141 = vector.extract_strided_slice %140 {offsets = [0, 0], sizes = [8, 128], strides = [1, 1]} : vector<8x512xf32> to vector<8x128xf32>
    %142 = arith.negf %141 : vector<8x128xf32>
    %143 = math.exp %142 : vector<8x128xf32>
    %cst_41 = arith.constant 1.000000e+00 : f32
    %144 = vector.broadcast %cst_41 : f32 to vector<8x128xf32>
    %145 = arith.addf %144, %143 : vector<8x128xf32>
    %146 = arith.divf %144, %145 : vector<8x128xf32>
    %147 = vector.extract_strided_slice %140 {offsets = [0, 128], sizes = [8, 128], strides = [1, 1]} : vector<8x512xf32> to vector<8x128xf32>
    %148 = arith.negf %147 : vector<8x128xf32>
    %149 = math.exp %148 : vector<8x128xf32>
    %cst_42 = arith.constant 1.000000e+00 : f32
    %150 = vector.broadcast %cst_42 : f32 to vector<8x128xf32>
    %151 = arith.addf %150, %149 : vector<8x128xf32>
    %152 = arith.divf %150, %151 : vector<8x128xf32>
    %153 = vector.extract_strided_slice %140 {offsets = [0, 256], sizes = [8, 128], strides = [1, 1]} : vector<8x512xf32> to vector<8x128xf32>
    %154 = math.tanh %153 : vector<8x128xf32>
    %155 = vector.extract_strided_slice %140 {offsets = [0, 384], sizes = [8, 128], strides = [1, 1]} : vector<8x512xf32> to vector<8x128xf32>
    %156 = arith.negf %155 : vector<8x128xf32>
    %157 = math.exp %156 : vector<8x128xf32>
    %cst_43 = arith.constant 1.000000e+00 : f32
    %158 = vector.broadcast %cst_43 : f32 to vector<8x128xf32>
    %159 = arith.addf %158, %157 : vector<8x128xf32>
    %160 = arith.divf %158, %159 : vector<8x128xf32>
    %161 = arith.mulf %152, %132 : vector<8x128xf32>
    %162 = arith.mulf %146, %154 : vector<8x128xf32>
    %163 = arith.addf %161, %162 : vector<8x128xf32>
    %164 = math.tanh %163 : vector<8x128xf32>
    %165 = arith.mulf %160, %164 : vector<8x128xf32>
    %c5_i32 = arith.constant 5 : i32
    %c8_i32_44 = arith.constant 8 : i32
    %166 = arith.muli %c5_i32, %c8_i32_44 : i32
    %167 = tpu.assume_multiple %166, 8 : i32
    %168 = arith.index_cast %167 : i32 to index
    %c0_45 = arith.constant 0 : index
    %169 = vector.load %arg10[%168, %c0_45] : memref<64x512xf32, #tpu.memory_space<vmem>>, vector<8x512xf32>
    %cst_46 = arith.constant dense<0.000000e+00> : vector<8x512xf32>
    %170 = tpu.matmul %165, %8, %cst_46 {dimension_numbers = #tpu.dot_dimension_numbers<[1], [0], [0], [1], [0, 0, 1, 1], [], []>} : vector<8x128xf32>, vector<128x512xf32>, vector<8x512xf32> -> vector<8x512xf32>
    %171 = arith.addf %169, %170 : vector<8x512xf32>
    %172 = vector.extract_strided_slice %171 {offsets = [0, 0], sizes = [8, 128], strides = [1, 1]} : vector<8x512xf32> to vector<8x128xf32>
    %173 = arith.negf %172 : vector<8x128xf32>
    %174 = math.exp %173 : vector<8x128xf32>
    %cst_47 = arith.constant 1.000000e+00 : f32
    %175 = vector.broadcast %cst_47 : f32 to vector<8x128xf32>
    %176 = arith.addf %175, %174 : vector<8x128xf32>
    %177 = arith.divf %175, %176 : vector<8x128xf32>
    %178 = vector.extract_strided_slice %171 {offsets = [0, 128], sizes = [8, 128], strides = [1, 1]} : vector<8x512xf32> to vector<8x128xf32>
    %179 = arith.negf %178 : vector<8x128xf32>
    %180 = math.exp %179 : vector<8x128xf32>
    %cst_48 = arith.constant 1.000000e+00 : f32
    %181 = vector.broadcast %cst_48 : f32 to vector<8x128xf32>
    %182 = arith.addf %181, %180 : vector<8x128xf32>
    %183 = arith.divf %181, %182 : vector<8x128xf32>
    %184 = vector.extract_strided_slice %171 {offsets = [0, 256], sizes = [8, 128], strides = [1, 1]} : vector<8x512xf32> to vector<8x128xf32>
    %185 = math.tanh %184 : vector<8x128xf32>
    %186 = vector.extract_strided_slice %171 {offsets = [0, 384], sizes = [8, 128], strides = [1, 1]} : vector<8x512xf32> to vector<8x128xf32>
    %187 = arith.negf %186 : vector<8x128xf32>
    %188 = math.exp %187 : vector<8x128xf32>
    %cst_49 = arith.constant 1.000000e+00 : f32
    %189 = vector.broadcast %cst_49 : f32 to vector<8x128xf32>
    %190 = arith.addf %189, %188 : vector<8x128xf32>
    %191 = arith.divf %189, %190 : vector<8x128xf32>
    %192 = arith.mulf %183, %163 : vector<8x128xf32>
    %193 = arith.mulf %177, %185 : vector<8x128xf32>
    %194 = arith.addf %192, %193 : vector<8x128xf32>
    %195 = math.tanh %194 : vector<8x128xf32>
    %196 = arith.mulf %191, %195 : vector<8x128xf32>
    %c6_i32 = arith.constant 6 : i32
    %c8_i32_50 = arith.constant 8 : i32
    %197 = arith.muli %c6_i32, %c8_i32_50 : i32
    %198 = tpu.assume_multiple %197, 8 : i32
    %199 = arith.index_cast %198 : i32 to index
    %c0_51 = arith.constant 0 : index
    %200 = vector.load %arg10[%199, %c0_51] : memref<64x512xf32, #tpu.memory_space<vmem>>, vector<8x512xf32>
    %cst_52 = arith.constant dense<0.000000e+00> : vector<8x512xf32>
    %201 = tpu.matmul %196, %8, %cst_52 {dimension_numbers = #tpu.dot_dimension_numbers<[1], [0], [0], [1], [0, 0, 1, 1], [], []>} : vector<8x128xf32>, vector<128x512xf32>, vector<8x512xf32> -> vector<8x512xf32>
    %202 = arith.addf %200, %201 : vector<8x512xf32>
    %203 = vector.extract_strided_slice %202 {offsets = [0, 0], sizes = [8, 128], strides = [1, 1]} : vector<8x512xf32> to vector<8x128xf32>
    %204 = arith.negf %203 : vector<8x128xf32>
    %205 = math.exp %204 : vector<8x128xf32>
    %cst_53 = arith.constant 1.000000e+00 : f32
    %206 = vector.broadcast %cst_53 : f32 to vector<8x128xf32>
    %207 = arith.addf %206, %205 : vector<8x128xf32>
    %208 = arith.divf %206, %207 : vector<8x128xf32>
    %209 = vector.extract_strided_slice %202 {offsets = [0, 128], sizes = [8, 128], strides = [1, 1]} : vector<8x512xf32> to vector<8x128xf32>
    %210 = arith.negf %209 : vector<8x128xf32>
    %211 = math.exp %210 : vector<8x128xf32>
    %cst_54 = arith.constant 1.000000e+00 : f32
    %212 = vector.broadcast %cst_54 : f32 to vector<8x128xf32>
    %213 = arith.addf %212, %211 : vector<8x128xf32>
    %214 = arith.divf %212, %213 : vector<8x128xf32>
    %215 = vector.extract_strided_slice %202 {offsets = [0, 256], sizes = [8, 128], strides = [1, 1]} : vector<8x512xf32> to vector<8x128xf32>
    %216 = math.tanh %215 : vector<8x128xf32>
    %217 = vector.extract_strided_slice %202 {offsets = [0, 384], sizes = [8, 128], strides = [1, 1]} : vector<8x512xf32> to vector<8x128xf32>
    %218 = arith.negf %217 : vector<8x128xf32>
    %219 = math.exp %218 : vector<8x128xf32>
    %cst_55 = arith.constant 1.000000e+00 : f32
    %220 = vector.broadcast %cst_55 : f32 to vector<8x128xf32>
    %221 = arith.addf %220, %219 : vector<8x128xf32>
    %222 = arith.divf %220, %221 : vector<8x128xf32>
    %223 = arith.mulf %214, %194 : vector<8x128xf32>
    %224 = arith.mulf %208, %216 : vector<8x128xf32>
    %225 = arith.addf %223, %224 : vector<8x128xf32>
    %226 = math.tanh %225 : vector<8x128xf32>
    %227 = arith.mulf %222, %226 : vector<8x128xf32>
    %c7_i32 = arith.constant 7 : i32
    %c8_i32_56 = arith.constant 8 : i32
    %228 = arith.muli %c7_i32, %c8_i32_56 : i32
    %229 = tpu.assume_multiple %228, 8 : i32
    %230 = arith.index_cast %229 : i32 to index
    %c0_57 = arith.constant 0 : index
    %231 = vector.load %arg10[%230, %c0_57] : memref<64x512xf32, #tpu.memory_space<vmem>>, vector<8x512xf32>
    %cst_58 = arith.constant dense<0.000000e+00> : vector<8x512xf32>
    %232 = tpu.matmul %227, %8, %cst_58 {dimension_numbers = #tpu.dot_dimension_numbers<[1], [0], [0], [1], [0, 0, 1, 1], [], []>} : vector<8x128xf32>, vector<128x512xf32>, vector<8x512xf32> -> vector<8x512xf32>
    %233 = arith.addf %231, %232 : vector<8x512xf32>
    %234 = vector.extract_strided_slice %233 {offsets = [0, 0], sizes = [8, 128], strides = [1, 1]} : vector<8x512xf32> to vector<8x128xf32>
    %235 = arith.negf %234 : vector<8x128xf32>
    %236 = math.exp %235 : vector<8x128xf32>
    %cst_59 = arith.constant 1.000000e+00 : f32
    %237 = vector.broadcast %cst_59 : f32 to vector<8x128xf32>
    %238 = arith.addf %237, %236 : vector<8x128xf32>
    %239 = arith.divf %237, %238 : vector<8x128xf32>
    %240 = vector.extract_strided_slice %233 {offsets = [0, 128], sizes = [8, 128], strides = [1, 1]} : vector<8x512xf32> to vector<8x128xf32>
    %241 = arith.negf %240 : vector<8x128xf32>
    %242 = math.exp %241 : vector<8x128xf32>
    %cst_60 = arith.constant 1.000000e+00 : f32
    %243 = vector.broadcast %cst_60 : f32 to vector<8x128xf32>
    %244 = arith.addf %243, %242 : vector<8x128xf32>
    %245 = arith.divf %243, %244 : vector<8x128xf32>
    %246 = vector.extract_strided_slice %233 {offsets = [0, 256], sizes = [8, 128], strides = [1, 1]} : vector<8x512xf32> to vector<8x128xf32>
    %247 = math.tanh %246 : vector<8x128xf32>
    %248 = vector.extract_strided_slice %233 {offsets = [0, 384], sizes = [8, 128], strides = [1, 1]} : vector<8x512xf32> to vector<8x128xf32>
    %249 = arith.negf %248 : vector<8x128xf32>
    %250 = math.exp %249 : vector<8x128xf32>
    %cst_61 = arith.constant 1.000000e+00 : f32
    %251 = vector.broadcast %cst_61 : f32 to vector<8x128xf32>
    %252 = arith.addf %251, %250 : vector<8x128xf32>
    %253 = arith.divf %251, %252 : vector<8x128xf32>
    %254 = arith.mulf %245, %225 : vector<8x128xf32>
    %255 = arith.mulf %239, %247 : vector<8x128xf32>
    %256 = arith.addf %254, %255 : vector<8x128xf32>
    %257 = math.tanh %256 : vector<8x128xf32>
    %258 = arith.mulf %253, %257 : vector<8x128xf32>
    %c8_i32_62 = arith.constant 8 : i32
    %c0_63 = arith.constant 0 : index
    %c0_64 = arith.constant 0 : index
    %259 = vector.load %arg6[%c0_63, %c0_64] : memref<128x128xf32, #tpu.memory_space<vmem>>, vector<128x128xf32>
    %cst_65 = arith.constant dense<0.000000e+00> : vector<8x128xf32>
    %260 = tpu.matmul %258, %259, %cst_65 {dimension_numbers = #tpu.dot_dimension_numbers<[1], [0], [0], [1], [0, 0, 1, 1], [], []>} : vector<8x128xf32>, vector<128x128xf32>, vector<8x128xf32> -> vector<8x128xf32>
    %c0_66 = arith.constant 0 : index
    %c0_67 = arith.constant 0 : index
    %261 = vector.load %arg7[%c0_66, %c0_67] : memref<1x128xf32, #tpu.memory_space<vmem>>, vector<1x128xf32>
    %262 = vector.broadcast %261 : vector<1x128xf32> to vector<8x128xf32>
    %263 = arith.addf %260, %262 : vector<8x128xf32>
    %c0_68 = arith.constant 0 : index
    %c0_69 = arith.constant 0 : index
    %264 = vector.load %arg8[%c0_68, %c0_69] : memref<8x128xf32, #tpu.memory_space<vmem>>, vector<8x128xf32>
    tpu.vector_store %arg8[%c0_68, %c0_69], %263 {strides = array<i32>} : memref<8x128xf32, #tpu.memory_space<vmem>>, vector<8x128xf32>,
    return
  }
  func.func @transform_0(%arg0: i32, %arg1: memref<64xi32, #tpu.memory_space<smem>>) -> (i32, i32) {
    %c0_i32 = arith.constant 0 : i32
    %c0_i32_0 = arith.constant 0 : i32
    %c0_i32_1 = arith.constant 0 : i32
    return %c0_i32, %c0_i32_0 : i32, i32
  }
  func.func @transform_1(%arg0: i32, %arg1: memref<64xi32, #tpu.memory_space<smem>>) -> (i32, i32) {
    %c0_i32 = arith.constant 0 : i32
    %c0_i32_0 = arith.constant 0 : i32
    %c0_i32_1 = arith.constant 0 : i32
    return %c0_i32, %c0_i32_0 : i32, i32
  }
  func.func @transform_2(%arg0: i32, %arg1: memref<64xi32, #tpu.memory_space<smem>>) -> (i32, i32) {
    %c0_i32 = arith.constant 0 : i32
    %c0_i32_0 = arith.constant 0 : i32
    %c0_i32_1 = arith.constant 0 : i32
    return %c0_i32, %c0_i32_0 : i32, i32
  }
  func.func @transform_3(%arg0: i32, %arg1: memref<64xi32, #tpu.memory_space<smem>>) -> (i32, i32) {
    %c0_i32 = arith.constant 0 : i32
    %c0_i32_0 = arith.constant 0 : i32
    %c0_i32_1 = arith.constant 0 : i32
    return %c0_i32, %c0_i32_0 : i32, i32
  }
  func.func @transform_4(%arg0: i32, %arg1: memref<64xi32, #tpu.memory_space<smem>>) -> (i32, i32) {
    %c0_i32 = arith.constant 0 : i32
    %c0_i32_0 = arith.constant 0 : i32
    %c0_i32_1 = arith.constant 0 : i32
    return %c0_i32, %c0_i32_0 : i32, i32
  }
  func.func @transform_5(%arg0: i32, %arg1: memref<64xi32, #tpu.memory_space<smem>>) -> (i32, i32) {
    %c0_i32 = arith.constant 0 : i32
    %c0_i32_0 = arith.constant 0 : i32
    %c0_i32_1 = arith.constant 0 : i32
    return %c0_i32, %c0_i32_0 : i32, i32
  }
  func.func @transform_6(%arg0: i32, %arg1: memref<64xi32, #tpu.memory_space<smem>>) -> (i32, i32) {
    %c0_i32 = arith.constant 0 : i32
    %c0_i32_0 = arith.constant 0 : i32
    return %arg0, %c0_i32 : i32, i32
  }
}

</mosaic_0001>

<llo_original>
// kernel: tpu_custom_call.1
$region0: #{tpu_custom_call.1}
  #allocation0 [shape = 'u32[]', space=smem, size = 0x4, offset = 0x4, fixed_abs, tag = 'smem constant byte address 0x4 - core index']
  #allocation1 [shape = 'u32[144,128]{1,0:T(1,128)}', space=vmem, size = 0x12000, scoped, tag = 'internal scratch']
  #allocation2 [shape = 'f32[64,128]{1,0:T(8,128)}', space=vmem, size = 0x8000, scoped, tag = 'scratch operand']
  #allocation3 [shape = 'f32[64,512]{1,0:T(8,128)}', space=vmem, size = 0x20000, scoped, tag = 'scratch operand']
  #allocation4 [shape = 's32[1]{0}', space=sflag, size = 0x4, scoped, tag = 'scoped memory for tpu_custom_call.1']
  #allocation5 [shape = 'u8[512]{0}', space=smem, size = 0x200, scoped, tag = 'prefetched SMEM operand 0']
  %s0 = inlined_call_operand.hbm [shape: s32[64], index: 0, kind: input, shape index: {}]
  %s1 = inlined_call_operand.hbm [shape: f32[32,128], index: 1, kind: input, shape index: {}]
  %s2 = inlined_call_operand.hbm [shape: f32[128,512], index: 2, kind: input, shape index: {}]
  %s3 = inlined_call_operand.hbm [shape: f32[128,512], index: 3, kind: input, shape index: {}]
  %s4 = inlined_call_operand.vmem [shape: f32[1,512], index: 4, kind: input, shape index: {}]
  %s5 = inlined_call_operand.hbm [shape: f32[128,128], index: 5, kind: input, shape index: {}]
  %s6 = inlined_call_operand.vmem [shape: f32[1,128], index: 6, kind: input, shape index: {}]
  %s7 = inlined_call_operand.hbm [shape: f32[8,128], index: 7, kind: output, shape index: {}]
  %s8 = sld [smem:[#allocation0]]
  $region57: #{tpu_custom_call.1} parent=0
    _
  %s10 = ssub.s32 1, %s8
  %s11 = scalar_select 0, %s10, %s8
  %13 = dma.hbm_to_smem %s0, 16, [#allocation5], [#allocation4]
  %14 = dma.done [#allocation4], 16
  %15 = sfence
  $region1: #{tpu_custom_call.1} parent=0
    #allocation6 [shape = 'u8[16384]{0}', space=vmem, size = 0x4000, scoped, tag = 'input window, operand 1, single buffered']
    #allocation7 [shape = 's32[1]{0}', space=sflag, size = 0x4, scoped, tag = 'scoped memory for tpu_custom_call.1']
    #allocation8 [shape = 's32[1]{0}', space=sflag, size = 0x4, scoped, tag = 'scoped memory for tpu_custom_call.1']
    #allocation9 [shape = 'u8[262144]{0}', space=vmem, size = 0x40000, scoped, tag = 'input window, operand 2, single buffered']
    #allocation10 [shape = 's32[1]{0}', space=sflag, size = 0x4, scoped, tag = 'scoped memory for tpu_custom_call.1']
    #allocation11 [shape = 'u8[262144]{0}', space=vmem, size = 0x40000, scoped, tag = 'input window, operand 3, single buffered']
    #allocation12 [shape = 'u8[65536]{0}', space=vmem, size = 0x10000, scoped, tag = 'input window, operand 5, single buffered']
    #allocation13 [shape = 's32[1]{0}', space=sflag, size = 0x4, scoped, tag = 'scoped memory for tpu_custom_call.1']
    #allocation14 [shape = 'u8[4096]{0}', space=vmem, size = 0x1000, scoped, tag = 'output window, operand 0, single buffered']
    %16 = vsyncpa [#allocation7], 0
    %17 = vsyncpa [#allocation10], 0
    %18 = vsyncpa [#allocation13], 0
    %19 = vsyncpa [#allocation8], 0
    // Predicated region
    $region2: #{tpu_custom_call.1} parent=1 // pred_check
      _
    $region3: #{tpu_custom_call.1} parent=1 // pred_check_branch
      %21 = sbr.rel (0) target = $region5
    $region4: #{tpu_custom_call.1} parent=1 // pred_region
      %s23 = ssub.s32 512, 512
      %24 = vsyncadd [#allocation7], %s23
      %s25 = sshll.u32 [#allocation6], 4
      %s26 = int_to_ptr.vmem [resolvable:$true] %s25
      %31 = dma.hbm_to_vmem [thread:$0]  %s1, 512, %s26, [#allocation7], 128, 128, 8
    $region5: #{tpu_custom_call.1} parent=1 // pred_fallthru
      _
    // Predicated region
    $region6: #{tpu_custom_call.1} parent=1 // pred_check
      _
    $region7: #{tpu_custom_call.1} parent=1 // pred_check_branch
      %33 = sbr.rel (0) target = $region9
    $region8: #{tpu_custom_call.1} parent=1 // pred_region
      %s35 = ssub.s32 8192, 8192
      %36 = vsyncadd [#allocation10], %s35
      %s37 = sshll.u32 [#allocation9], 4
      %s38 = int_to_ptr.vmem [resolvable:$true] %s37
      %43 = dma.hbm_to_vmem [thread:$0]  %s2, 8192, %s38, [#allocation10], 512, 512, 32
    $region9: #{tpu_custom_call.1} parent=1 // pred_fallthru
      _
    // Predicated region
    $region10: #{tpu_custom_call.1} parent=1 // pred_check
      _
    $region11: #{tpu_custom_call.1} parent=1 // pred_check_branch
      %45 = sbr.rel (0) target = $region13
    $region12: #{tpu_custom_call.1} parent=1 // pred_region
      %s47 = ssub.s32 8192, 8192
      %48 = vsyncadd [#allocation10], %s47
      %s49 = sshll.u32 [#allocation11], 4
      %s50 = int_to_ptr.vmem [resolvable:$true] %s49
      %55 = dma.hbm_to_vmem [thread:$0]  %s3, 8192, %s50, [#allocation10], 512, 512, 32
    $region13: #{tpu_custom_call.1} parent=1 // pred_fallthru
      _
    // Predicated region
    $region14: #{tpu_custom_call.1} parent=1 // pred_check
      _
    $region15: #{tpu_custom_call.1} parent=1 // pred_check_branch
      %57 = sbr.rel (0) target = $region17
    $region16: #{tpu_custom_call.1} parent=1 // pred_region
      _
    $region17: #{tpu_custom_call.1} parent=1 // pred_fallthru
      _
    // Predicated region
    $region18: #{tpu_custom_call.1} parent=1 // pred_check
      _
    $region19: #{tpu_custom_call.1} parent=1 // pred_check_branch
      %59 = sbr.rel (0) target = $region21
    $region20: #{tpu_custom_call.1} parent=1 // pred_region
      %s61 = ssub.s32 2048, 2048
      %62 = vsyncadd [#allocation13], %s61
      %s63 = sshll.u32 [#allocation12], 4
      %s64 = int_to_ptr.vmem [resolvable:$true] %s63
      %69 = dma.hbm_to_vmem [thread:$0]  %s5, 2048, %s64, [#allocation13], 128, 128, 8
    $region21: #{tpu_custom_call.1} parent=1 // pred_fallthru
      _
    // Predicated region
    $region22: #{tpu_custom_call.1} parent=1 // pred_check
      _
    $region23: #{tpu_custom_call.1} parent=1 // pred_check_branch
      %71 = sbr.rel (0) target = $region25
    $region24: #{tpu_custom_call.1} parent=1 // pred_region
      _
    $region25: #{tpu_custom_call.1} parent=1 // pred_fallthru
      _
    // Predicated region
    $region26: #{tpu_custom_call.1} parent=1 // pred_check
      _
    $region27: #{tpu_custom_call.1} parent=1 // pred_check_branch
      %73 = sbr.rel (0) target = $region29
    $region28: #{tpu_custom_call.1} parent=1 // pred_region
      %74 = dma.done [#allocation7], 512
    $region29: #{tpu_custom_call.1} parent=1 // pred_fallthru
      _
    // Predicated region
    $region30: #{tpu_custom_call.1} parent=1 // pred_check
      _
    $region31: #{tpu_custom_call.1} parent=1 // pred_check_branch
      %76 = sbr.rel (0) target = $region33
    $region32: #{tpu_custom_call.1} parent=1 // pred_region
      %77 = dma.done [#allocation10], 8192
    $region33: #{tpu_custom_call.1} parent=1 // pred_fallthru
      _
    // Predicated region
    $region34: #{tpu_custom_call.1} parent=1 // pred_check
      _
    $region35: #{tpu_custom_call.1} parent=1 // pred_check_branch
      %79 = sbr.rel (0) target = $region37
    $region36: #{tpu_custom_call.1} parent=1 // pred_region
      %80 = dma.done [#allocation10], 8192
    $region37: #{tpu_custom_call.1} parent=1 // pred_fallthru
      _
    // Predicated region
    $region38: #{tpu_custom_call.1} parent=1 // pred_check
      _
    $region39: #{tpu_custom_call.1} parent=1 // pred_check_branch
      %82 = sbr.rel (0) target = $region41
    $region40: #{tpu_custom_call.1} parent=1 // pred_region
      %83 = dma.done [#allocation13], 2048
    $region41: #{tpu_custom_call.1} parent=1 // pred_fallthru
      _
    loop: start=0, step=1, limit=8
    $region42: #{tpu_custom_call.1} parent=1 // loop_pre_header
      _
    $region43: #{tpu_custom_call.1} parent=1 // loop_header
      %s85 = sphi 0, %s89
      %p86 = scmp.ge.s32.totalorder %s85, 8
    $region44: #{tpu_custom_call.1} parent=1 // loop_header_branch
      %88 = sbr.rel (%p86) target = $region48
    $region45: #{tpu_custom_call.1} parent=1 // loop_body
      %s90 = smul.u32 %s85, 8
      %s91 = smul.u32 0, 8
      %s92 = sadd.s32 %s90, %s91
      %s93 = sld [smem:[#allocation5 + %s92]]
      %s94 = scalar_lea.vmem [#allocation6], %s93
      %v95 = vld [vmem:[%s94] sm:$0x1]
      %s96 = sadd.s32 %s92, 1
      %s97 = sld [smem:[#allocation5 + %s96]]
      %s98 = scalar_lea.vmem [#allocation6], %s97
      %v99 = vld [vmem:[%s98] sm:$0x1]
      %s100 = sadd.s32 %s92, 2
      %s101 = sld [smem:[#allocation5 + %s100]]
      %s102 = scalar_lea.vmem [#allocation6], %s101
      %v103 = vld [vmem:[%s102] sm:$0x1]
      %s104 = sadd.s32 %s92, 3
      %s105 = sld [smem:[#allocation5 + %s104]]
      %s106 = scalar_lea.vmem [#allocation6], %s105
      %v107 = vld [vmem:[%s106] sm:$0x1]
      %s108 = sadd.s32 %s92, 4
      %s109 = sld [smem:[#allocation5 + %s108]]
      %s110 = scalar_lea.vmem [#allocation6], %s109
      %v111 = vld [vmem:[%s110] sm:$0x1]
      %s112 = sadd.s32 %s92, 5
      %s113 = sld [smem:[#allocation5 + %s112]]
      %s114 = scalar_lea.vmem [#allocation6], %s113
      %v115 = vld [vmem:[%s114] sm:$0x1]
      %s116 = sadd.s32 %s92, 6
      %s117 = sld [smem:[#allocation5 + %s116]]
      %s118 = scalar_lea.vmem [#allocation6], %s117
      %v119 = vld [vmem:[%s118] sm:$0x1]
      %s120 = sadd.s32 %s92, 7
      %s121 = sld [smem:[#allocation5 + %s120]]
      %s122 = scalar_lea.vmem [#allocation6], %s121
      %v123 = vld [vmem:[%s122] sm:$0x1]
      %v125 = vrot.slane %v99, 7
      %v128 = vrot.slane %v103, 6
      %v131 = vrot.slane %v107, 5
      %v134 = vrot.slane %v111, 4
      %v137 = vrot.slane %v115, 3
      %v140 = vrot.slane %v119, 2
      %v143 = vrot.slane %v123, 1
      %vm145 = vcmask 1040384
      %v146 = vsel %vm145, %v95, %v125
      %vm147 = vcmask 1041408
      %v148 = vsel %vm147, %v146, %v128
      %vm149 = vcmask 1042432
      %v150 = vsel %vm149, %v148, %v131
      %vm151 = vcmask 1043456
      %v152 = vsel %vm151, %v150, %v134
      %vm153 = vcmask 1044480
      %v154 = vsel %vm153, %v152, %v137
      %vm155 = vcmask 1045504
      %v156 = vsel %vm155, %v154, %v140
      %vm157 = vcmask 1046528
      %v158 = vsel %vm157, %v156, %v143
      %s159 = scalar_lea.vmem [#allocation2], %s90
      %160 = vst [vmem:[%s159] sm:$0xff] %v158
    $region46: #{tpu_custom_call.1} parent=1 // loop_footer
      %s89 = sadd.s32 1, %s85
    $region47: #{tpu_custom_call.1} parent=1 // loop_footer_branch
      %84 = sbr.rel target = $region43
    $region48: #{tpu_custom_call.1} parent=1 // loop_exit
      _
    %v161 = vld [vmem:[#allocation2] sm:$0xff]
    %v162 = vld [vmem:[#allocation2 + $0x8] sm:$0xff]
    %v163 = vld [vmem:[#allocation2 + $0x10] sm:$0xff]
    %v164 = vld [vmem:[#allocation2 + $0x18] sm:$0xff]
    %v165 = vld [vmem:[#allocation2 + $0x20] sm:$0xff]
    %v166 = vld [vmem:[#allocation2 + $0x28] sm:$0xff]
    %v167 = vld [vmem:[#allocation2 + $0x30] sm:$0xff]
    %v168 = vld [vmem:[#allocation2 + $0x38] sm:$0xff]
    %v169 = vld [vmem:[#allocation9] sm:$0xff]
    %v170 = vld [vmem:[#allocation9 + $0x8] sm:$0xff]
    %v171 = vld [vmem:[#allocation9 + $0x10] sm:$0xff]
    %v172 = vld [vmem:[#allocation9 + $0x18] sm:$0xff]
    %v173 = vld [vmem:[#allocation9 + $0x20] sm:$0xff]
    %v174 = vld [vmem:[#allocation9 + $0x28] sm:$0xff]
    %v175 = vld [vmem:[#allocation9 + $0x30] sm:$0xff]
    %v176 = vld [vmem:[#allocation9 + $0x38] sm:$0xff]
    %v177 = vld [vmem:[#allocation9 + $0x40] sm:$0xff]
    %v178 = vld [vmem:[#allocation9 + $0x48] sm:$0xff]
    %v179 = vld [vmem:[#allocation9 + $0x50] sm:$0xff]
    %v180 = vld [vmem:[#allocation9 + $0x58] sm:$0xff]
    %v181 = vld [vmem:[#allocation9 + $0x60] sm:$0xff]
    %v182 = vld [vmem:[#allocation9 + $0x68] sm:$0xff]
    %v183 = vld [vmem:[#allocation9 + $0x70] sm:$0xff]
    %v184 = vld [vmem:[#allocation9 + $0x78] sm:$0xff]
    %v185 = vld [vmem:[#allocation9 + $0x80] sm:$0xff]
    %v186 = vld [vmem:[#allocation9 + $0x88] sm:$0xff]
    %v187 = vld [vmem:[#allocation9 + $0x90] sm:$0xff]
    %v188 = vld [vmem:[#allocation9 + $0x98] sm:$0xff]
    %v189 = vld [vmem:[#allocation9 + $0xa0] sm:$0xff]
    %v190 = vld [vmem:[#allocation9 + $0xa8] sm:$0xff]
    %v191 = vld [vmem:[#allocation9 + $0xb0] sm:$0xff]
    %v192 = vld [vmem:[#allocation9 + $0xb8] sm:$0xff]
    %v193 = vld [vmem:[#allocation9 + $0xc0] sm:$0xff]
    %v194 = vld [vmem:[#allocation9 + $0xc8] sm:$0xff]
    %v195 = vld [vmem:[#allocation9 + $0xd0] sm:$0xff]
    %v196 = vld [vmem:[#allocation9 + $0xd8] sm:$0xff]
    %v197 = vld [vmem:[#allocation9 + $0xe0] sm:$0xff]
    %v198 = vld [vmem:[#allocation9 + $0xe8] sm:$0xff]
    %v199 = vld [vmem:[#allocation9 + $0xf0] sm:$0xff]
    %v200 = vld [vmem:[#allocation9 + $0xf8] sm:$0xff]
    %v201 = vld [vmem:[#allocation9 + $0x100] sm:$0xff]
    %v202 = vld [vmem:[#allocation9 + $0x108] sm:$0xff]
    %v203 = vld [vmem:[#allocation9 + $0x110] sm:$0xff]
    %v204 = vld [vmem:[#allocation9 + $0x118] sm:$0xff]
    %v205 = vld [vmem:[#allocation9 + $0x120] sm:$0xff]
    %v206 = vld [vmem:[#allocation9 + $0x128] sm:$0xff]
    %v207 = vld [vmem:[#allocation9 + $0x130] sm:$0xff]
    %v208 = vld [vmem:[#allocation9 + $0x138] sm:$0xff]
    %v209 = vld [vmem:[#allocation9 + $0x140] sm:$0xff]
    %v210 = vld [vmem:[#allocation9 + $0x148] sm:$0xff]
    %v211 = vld [vmem:[#allocation9 + $0x150] sm:$0xff]
    %v212 = vld [vmem:[#allocation9 + $0x158] sm:$0xff]
    %v213 = vld [vmem:[#allocation9 + $0x160] sm:$0xff]
    %v214 = vld [vmem:[#allocation9 + $0x168] sm:$0xff]
    %v215 = vld [vmem:[#allocation9 + $0x170] sm:$0xff]
    %v216 = vld [vmem:[#allocation9 + $0x178] sm:$0xff]
    %v217 = vld [vmem:[#allocation9 + $0x180] sm:$0xff]
    %v218 = vld [vmem:[#allocation9 + $0x188] sm:$0xff]
    %v219 = vld [vmem:[#allocation9 + $0x190] sm:$0xff]
    %v220 = vld [vmem:[#allocation9 + $0x198] sm:$0xff]
    %v221 = vld [vmem:[#allocation9 + $0x1a0] sm:$0xff]
    %v222 = vld [vmem:[#allocation9 + $0x1a8] sm:$0xff]
    %v223 = vld [vmem:[#allocation9 + $0x1b0] sm:$0xff]
    %v224 = vld [vmem:[#allocation9 + $0x1b8] sm:$0xff]
    %v225 = vld [vmem:[#allocation9 + $0x1c0] sm:$0xff]
    %v226 = vld [vmem:[#allocation9 + $0x1c8] sm:$0xff]
    %v227 = vld [vmem:[#allocation9 + $0x1d0] sm:$0xff]
    %v228 = vld [vmem:[#allocation9 + $0x1d8] sm:$0xff]
    %v229 = vld [vmem:[#allocation9 + $0x1e0] sm:$0xff]
    %v230 = vld [vmem:[#allocation9 + $0x1e8] sm:$0xff]
    %v231 = vld [vmem:[#allocation9 + $0x1f0] sm:$0xff]
    %v232 = vld [vmem:[#allocation9 + $0x1f8] sm:$0xff]
    %v233 = vld [vmem:[%s4] sm:$0xf]
    %v235 = vlaneseq
    %v236 = vshrl.u32 %v235, 7
    %v237 = vsub.s32 0, %v236
    %v238 = vrot.slane %v233, %v237
    %v239 = vlaneseq
    %v240 = vshrl.u32 %v239, 7
    %v241 = vsub.s32 1, %v240
    %v242 = vrot.slane %v233, %v241
    %v243 = vlaneseq
    %v244 = vshrl.u32 %v243, 7
    %v245 = vsub.s32 2, %v244
    %v246 = vrot.slane %v233, %v245
    %v247 = vlaneseq
    %v248 = vshrl.u32 %v247, 7
    %v249 = vsub.s32 3, %v248
    %v250 = vrot.slane %v233, %v249
    %255 = vmatprep.subr.mxu0 %v170
    %256 = vmatpush1.msra.mxu0 %v169
    %257 = vmatprep.subr.mxu0 %v174
    %258 = vmatpush1.msra.mxu0 %v173
    %259 = vmatprep.subr.mxu0 %v178
    %260 = vmatpush1.msra.mxu0 %v177
    %261 = vmatprep.subr.mxu0 %v182
    %262 = vmatpush1.msra.mxu0 %v181
    %263 = vmatprep.subr.mxu0 %v186
    %264 = vmatpush1.msra.mxu0 %v185
    %265 = vmatprep.subr.mxu0 %v190
    %266 = vmatpush1.msra.mxu0 %v189
    %267 = vmatprep.subr.mxu0 %v194
    %268 = vmatpush1.msra.mxu0 %v193
    %269 = vmatprep.subr.mxu0 %v198
    %270 = vmatpush1.msra.mxu0 %v197
    %271 = vmatprep.subr.mxu0 %v202
    %272 = vmatpush1.msra.mxu0 %v201
    %273 = vmatprep.subr.mxu0 %v206
    %274 = vmatpush1.msra.mxu0 %v205
    %275 = vmatprep.subr.mxu0 %v210
    %276 = vmatpush1.msra.mxu0 %v209
    %277 = vmatprep.subr.mxu0 %v214
    %278 = vmatpush1.msra.mxu0 %v213
    %279 = vmatprep.subr.mxu0 %v218
    %280 = vmatpush1.msra.mxu0 %v217
    %281 = vmatprep.subr.mxu0 %v222
    %282 = vmatpush1.msra.mxu0 %v221
    %283 = vmatprep.subr.mxu0 %v226
    %284 = vmatpush1.msra.mxu0 %v225
    %285 = vmatprep.subr.mxu0 %v230
    %286 = vmatpush1.msra.mxu0 %v229
    %287 = vmatprep.subr.mxu0 0.0
    %288 = vmatpush1.msra.mxu0 0.0
    %289 = vmatprep.subr.mxu0 0.0
    %290 = vmatpush1.msra.mxu0 0.0
    %291 = vmatprep.subr.mxu0 0.0
    %292 = vmatpush1.msra.mxu0 0.0
    %293 = vmatprep.subr.mxu0 0.0
    %294 = vmatpush1.msra.mxu0 0.0
    %295 = vmatprep.subr.mxu0 0.0
    %296 = vmatpush1.msra.mxu0 0.0
    %297 = vmatprep.subr.mxu0 0.0
    %298 = vmatpush1.msra.mxu0 0.0
    %299 = vmatprep.subr.mxu0 0.0
    %300 = vmatpush1.msra.mxu0 0.0
    %301 = vmatprep.subr.mxu0 0.0
    %302 = vmatpush1.msra.mxu0 0.0
    %303 = vmatprep.subr.mxu0 0.0
    %304 = vmatpush1.msra.mxu0 0.0
    %305 = vmatprep.subr.mxu0 0.0
    %306 = vmatpush1.msra.mxu0 0.0
    %307 = vmatprep.subr.mxu0 0.0
    %308 = vmatpush1.msra.mxu0 0.0
    %309 = vmatprep.subr.mxu0 0.0
    %310 = vmatpush1.msra.mxu0 0.0
    %311 = vmatprep.subr.mxu0 0.0
    %312 = vmatpush1.msra.mxu0 0.0
    %313 = vmatprep.subr.mxu0 0.0
    %314 = vmatpush1.msra.mxu0 0.0
    %315 = vmatprep.subr.mxu0 0.0
    %316 = vmatpush1.msra.mxu0 0.0
    %317 = vmatprep.subr.mxu0 0.0
    %318 = vmatpush1.msra.mxu0 0.0
    %319 = vmatprep.mubr.f32.mxu0 0.0
    %320 = vmatmul.mubr.f32.gmra.mrb[0].mxu0 %v161
    %v321 = vpop.f32.mrb[0].mxu0
    %v322 = vadd.f32 %v238, %v321
    %v323 = vpop.f32.mrb[0].mxu0
    %v324 = vadd.f32 %v242, %v323
    %325 = vmatprep.mubr.f32.mxu0 0.0
    %326 = vmatmul.mubr.f32.gmra.mrb[0].mxu0 %v162
    %v327 = vpop.f32.mrb[0].mxu0
    %v328 = vadd.f32 %v238, %v327
    %v329 = vpop.f32.mrb[0].mxu0
    %v330 = vadd.f32 %v242, %v329
    %331 = vmatprep.mubr.f32.mxu0 0.0
    %332 = vmatmul.mubr.f32.gmra.mrb[0].mxu0 %v163
    %v333 = vpop.f32.mrb[0].mxu0
    %v334 = vadd.f32 %v238, %v333
    %v335 = vpop.f32.mrb[0].mxu0
    %v336 = vadd.f32 %v242, %v335
    %337 = vmatprep.mubr.f32.mxu0 0.0
    %338 = vmatmul.mubr.f32.gmra.mrb[0].mxu0 %v164
    %v339 = vpop.f32.mrb[0].mxu0
    %v340 = vadd.f32 %v238, %v339
    %v341 = vpop.f32.mrb[0].mxu0
    %v342 = vadd.f32 %v242, %v341
    %343 = vmatprep.mubr.f32.mxu0 0.0
    %344 = vmatmul.mubr.f32.gmra.mrb[0].mxu0 %v165
    %v345 = vpop.f32.mrb[0].mxu0
    %v346 = vadd.f32 %v238, %v345
    %v347 = vpop.f32.mrb[0].mxu0
    %v348 = vadd.f32 %v242, %v347
    %349 = vmatprep.mubr.f32.mxu0 0.0
    %350 = vmatmul.mubr.f32.gmra.mrb[0].mxu0 %v166
    %v351 = vpop.f32.mrb[0].mxu0
    %v352 = vadd.f32 %v238, %v351
    %v353 = vpop.f32.mrb[0].mxu0
    %v354 = vadd.f32 %v242, %v353
    %355 = vmatprep.mubr.f32.mxu0 0.0
    %356 = vmatmul.mubr.f32.gmra.mrb[0].mxu0 %v167
    %v357 = vpop.f32.mrb[0].mxu0
    %v358 = vadd.f32 %v238, %v357
    %v359 = vpop.f32.mrb[0].mxu0
    %v360 = vadd.f32 %v242, %v359
    %361 = vmatprep.mubr.f32.mxu0 0.0
    %362 = vmatmul.mubr.f32.gmra.mrb[0].mxu0 %v168
    %v363 = vpop.f32.mrb[0].mxu0
    %v364 = vadd.f32 %v238, %v363
    %v365 = vpop.f32.mrb[0].mxu0
    %v366 = vadd.f32 %v242, %v365
    %367 = vdwg.mxu0
    %368 = vmatprep.subr.mxu0 %v172
    %369 = vmatpush1.msra.mxu0 %v171
    %370 = vmatprep.subr.mxu0 %v176
    %371 = vmatpush1.msra.mxu0 %v175
    %372 = vmatprep.subr.mxu0 %v180
    %373 = vmatpush1.msra.mxu0 %v179
    %374 = vmatprep.subr.mxu0 %v184
    %375 = vmatpush1.msra.mxu0 %v183
    %376 = vmatprep.subr.mxu0 %v188
    %377 = vmatpush1.msra.mxu0 %v187
    %378 = vmatprep.subr.mxu0 %v192
    %379 = vmatpush1.msra.mxu0 %v191
    %380 = vmatprep.subr.mxu0 %v196
    %381 = vmatpush1.msra.mxu0 %v195
    %382 = vmatprep.subr.mxu0 %v200
    %383 = vmatpush1.msra.mxu0 %v199
    %384 = vmatprep.subr.mxu0 %v204
    %385 = vmatpush1.msra.mxu0 %v203
    %386 = vmatprep.subr.mxu0 %v208
    %387 = vmatpush1.msra.mxu0 %v207
    %388 = vmatprep.subr.mxu0 %v212
    %389 = vmatpush1.msra.mxu0 %v211
    %390 = vmatprep.subr.mxu0 %v216
    %391 = vmatpush1.msra.mxu0 %v215
    %392 = vmatprep.subr.mxu0 %v220
    %393 = vmatpush1.msra.mxu0 %v219
    %394 = vmatprep.subr.mxu0 %v224
    %395 = vmatpush1.msra.mxu0 %v223
    %396 = vmatprep.subr.mxu0 %v228
    %397 = vmatpush1.msra.mxu0 %v227
    %398 = vmatprep.subr.mxu0 %v232
    %399 = vmatpush1.msra.mxu0 %v231
    %400 = vmatprep.subr.mxu0 0.0
    %401 = vmatpush1.msra.mxu0 0.0
    %402 = vmatprep.subr.mxu0 0.0
    %403 = vmatpush1.msra.mxu0 0.0
    %404 = vmatprep.subr.mxu0 0.0
    %405 = vmatpush1.msra.mxu0 0.0
    %406 = vmatprep.subr.mxu0 0.0
    %407 = vmatpush1.msra.mxu0 0.0
    %408 = vmatprep.subr.mxu0 0.0
    %409 = vmatpush1.msra.mxu0 0.0
    %410 = vmatprep.subr.mxu0 0.0
    %411 = vmatpush1.msra.mxu0 0.0
    %412 = vmatprep.subr.mxu0 0.0
    %413 = vmatpush1.msra.mxu0 0.0
    %414 = vmatprep.subr.mxu0 0.0
    %415 = vmatpush1.msra.mxu0 0.0
    %416 = vmatprep.subr.mxu0 0.0
    %417 = vmatpush1.msra.mxu0 0.0
    %418 = vmatprep.subr.mxu0 0.0
    %419 = vmatpush1.msra.mxu0 0.0
    %420 = vmatprep.subr.mxu0 0.0
    %421 = vmatpush1.msra.mxu0 0.0
    %422 = vmatprep.subr.mxu0 0.0
    %423 = vmatpush1.msra.mxu0 0.0
    %424 = vmatprep.subr.mxu0 0.0
    %425 = vmatpush1.msra.mxu0 0.0
    %426 = vmatprep.subr.mxu0 0.0
    %427 = vmatpush1.msra.mxu0 0.0
    %428 = vmatprep.subr.mxu0 0.0
    %429 = vmatpush1.msra.mxu0 0.0
    %430 = vmatprep.subr.mxu0 0.0
    %431 = vmatpush1.msra.mxu0 0.0
    %432 = vmatprep.mubr.f32.mxu0 0.0
    %433 = vmatmul.mubr.f32.gmra.mrb[0].mxu0 %v161
    %v434 = vpop.f32.mrb[0].mxu0
    %v435 = vadd.f32 %v246, %v434
    %v436 = vpop.f32.mrb[0].mxu0
    %v437 = vadd.f32 %v250, %v436
    %438 = vmatprep.mubr.f32.mxu0 0.0
    %439 = vmatmul.mubr.f32.gmra.mrb[0].mxu0 %v162
    %v440 = vpop.f32.mrb[0].mxu0
    %v441 = vadd.f32 %v246, %v440
    %v442 = vpop.f32.mrb[0].mxu0
    %v443 = vadd.f32 %v250, %v442
    %444 = vmatprep.mubr.f32.mxu0 0.0
    %445 = vmatmul.mubr.f32.gmra.mrb[0].mxu0 %v163
    %v446 = vpop.f32.mrb[0].mxu0
    %v447 = vadd.f32 %v246, %v446
    %v448 = vpop.f32.mrb[0].mxu0
    %v449 = vadd.f32 %v250, %v448
    %450 = vmatprep.mubr.f32.mxu0 0.0
    %451 = vmatmul.mubr.f32.gmra.mrb[0].mxu0 %v164
    %v452 = vpop.f32.mrb[0].mxu0
    %v453 = vadd.f32 %v246, %v452
    %v454 = vpop.f32.mrb[0].mxu0
    %v455 = vadd.f32 %v250, %v454
    %456 = vmatprep.mubr.f32.mxu0 0.0
    %457 = vmatmul.mubr.f32.gmra.mrb[0].mxu0 %v165
    %v458 = vpop.f32.mrb[0].mxu0
    %v459 = vadd.f32 %v246, %v458
    %v460 = vpop.f32.mrb[0].mxu0
    %v461 = vadd.f32 %v250, %v460
    %462 = vmatprep.mubr.f32.mxu0 0.0
    %463 = vmatmul.mubr.f32.gmra.mrb[0].mxu0 %v166
    %v464 = vpop.f32.mrb[0].mxu0
    %v465 = vadd.f32 %v246, %v464
    %v466 = vpop.f32.mrb[0].mxu0
    %v467 = vadd.f32 %v250, %v466
    %468 = vmatprep.mubr.f32.mxu0 0.0
    %469 = vmatmul.mubr.f32.gmra.mrb[0].mxu0 %v167
    %v470 = vpop.f32.mrb[0].mxu0
    %v471 = vadd.f32 %v246, %v470
    %v472 = vpop.f32.mrb[0].mxu0
    %v473 = vadd.f32 %v250, %v472
    %474 = vmatprep.mubr.f32.mxu0 0.0
    %475 = vmatmul.mubr.f32.gmra.mrb[0].mxu0 %v168
    %v476 = vpop.f32.mrb[0].mxu0
    %v477 = vadd.f32 %v246, %v476
    %v478 = vpop.f32.mrb[0].mxu0
    %v479 = vadd.f32 %v250, %v478
    %480 = vdwg.mxu0
    %481 = vst [vmem:[#allocation3] sm:$0xff] %v322
    %482 = vst [vmem:[#allocation3 + $0x8] sm:$0xff] %v324
    %483 = vst [vmem:[#allocation3 + $0x10] sm:$0xff] %v435
    %484 = vst [vmem:[#allocation3 + $0x18] sm:$0xff] %v437
    %485 = vst [vmem:[#allocation3 + $0x20] sm:$0xff] %v328
    %486 = vst [vmem:[#allocation3 + $0x28] sm:$0xff] %v330
    %487 = vst [vmem:[#allocation3 + $0x30] sm:$0xff] %v441
    %488 = vst [vmem:[#allocation3 + $0x38] sm:$0xff] %v443
    %489 = vst [vmem:[#allocation3 + $0x40] sm:$0xff] %v334
    %490 = vst [vmem:[#allocation3 + $0x48] sm:$0xff] %v336
    %491 = vst [vmem:[#allocation3 + $0x50] sm:$0xff] %v447
    %492 = vst [vmem:[#allocation3 + $0x58] sm:$0xff] %v449
    %493 = vst [vmem:[#allocation3 + $0x60] sm:$0xff] %v340
    %494 = vst [vmem:[#allocation3 + $0x68] sm:$0xff] %v342
    %495 = vst [vmem:[#allocation3 + $0x70] sm:$0xff] %v453
    %496 = vst [vmem:[#allocation3 + $0x78] sm:$0xff] %v455
    %497 = vst [vmem:[#allocation3 + $0x80] sm:$0xff] %v346
    %498 = vst [vmem:[#allocation3 + $0x88] sm:$0xff] %v348
    %499 = vst [vmem:[#allocation3 + $0x90] sm:$0xff] %v459
    %500 = vst [vmem:[#allocation3 + $0x98] sm:$0xff] %v461
    %501 = vst [vmem:[#allocation3 + $0xa0] sm:$0xff] %v352
    %502 = vst [vmem:[#allocation3 + $0xa8] sm:$0xff] %v354
    %503 = vst [vmem:[#allocation3 + $0xb0] sm:$0xff] %v465
    %504 = vst [vmem:[#allocation3 + $0xb8] sm:$0xff] %v467
    %505 = vst [vmem:[#allocation3 + $0xc0] sm:$0xff] %v358
    %506 = vst [vmem:[#allocation3 + $0xc8] sm:$0xff] %v360
    %507 = vst [vmem:[#allocation3 + $0xd0] sm:$0xff] %v471
    %508 = vst [vmem:[#allocation3 + $0xd8] sm:$0xff] %v473
    %509 = vst [vmem:[#allocation3 + $0xe0] sm:$0xff] %v364
    %510 = vst [vmem:[#allocation3 + $0xe8] sm:$0xff] %v366
    %511 = vst [vmem:[#allocation3 + $0xf0] sm:$0xff] %v477
    %512 = vst [vmem:[#allocation3 + $0xf8] sm:$0xff] %v479
    %v513 = vld [vmem:[#allocation11] sm:$0xff]
    %v514 = vld [vmem:[#allocation11 + $0x8] sm:$0xff]
    %v515 = vld [vmem:[#allocation11 + $0x10] sm:$0xff]
    %v516 = vld [vmem:[#allocation11 + $0x18] sm:$0xff]
    %v517 = vld [vmem:[#allocation11 + $0x20] sm:$0xff]
    %v518 = vld [vmem:[#allocation11 + $0x28] sm:$0xff]
    %v519 = vld [vmem:[#allocation11 + $0x30] sm:$0xff]
    %v520 = vld [vmem:[#allocation11 + $0x38] sm:$0xff]
    %v521 = vld [vmem:[#allocation11 + $0x40] sm:$0xff]
    %v522 = vld [vmem:[#allocation11 + $0x48] sm:$0xff]
    %v523 = vld [vmem:[#allocation11 + $0x50] sm:$0xff]
    %v524 = vld [vmem:[#allocation11 + $0x58] sm:$0xff]
    %v525 = vld [vmem:[#allocation11 + $0x60] sm:$0xff]
    %v526 = vld [vmem:[#allocation11 + $0x68] sm:$0xff]
    %v527 = vld [vmem:[#allocation11 + $0x70] sm:$0xff]
    %v528 = vld [vmem:[#allocation11 + $0x78] sm:$0xff]
    %v529 = vld [vmem:[#allocation11 + $0x80] sm:$0xff]
    %v530 = vld [vmem:[#allocation11 + $0x88] sm:$0xff]
    %v531 = vld [vmem:[#allocation11 + $0x90] sm:$0xff]
    %v532 = vld [vmem:[#allocation11 + $0x98] sm:$0xff]
    %v533 = vld [vmem:[#allocation11 + $0xa0] sm:$0xff]
    %v534 = vld [vmem:[#allocation11 + $0xa8] sm:$0xff]
    %v535 = vld [vmem:[#allocation11 + $0xb0] sm:$0xff]
    %v536 = vld [vmem:[#allocation11 + $0xb8] sm:$0xff]
    %v537 = vld [vmem:[#allocation11 + $0xc0] sm:$0xff]
    %v538 = vld [vmem:[#allocation11 + $0xc8] sm:$0xff]
    %v539 = vld [vmem:[#allocation11 + $0xd0] sm:$0xff]
    %v540 = vld [vmem:[#allocation11 + $0xd8] sm:$0xff]
    %v541 = vld [vmem:[#allocation11 + $0xe0] sm:$0xff]
    %v542 = vld [vmem:[#allocation11 + $0xe8] sm:$0xff]
    %v543 = vld [vmem:[#allocation11 + $0xf0] sm:$0xff]
    %v544 = vld [vmem:[#allocation11 + $0xf8] sm:$0xff]
    %v545 = vld [vmem:[#allocation11 + $0x100] sm:$0xff]
    %v546 = vld [vmem:[#allocation11 + $0x108] sm:$0xff]
    %v547 = vld [vmem:[#allocation11 + $0x110] sm:$0xff]
    %v548 = vld [vmem:[#allocation11 + $0x118] sm:$0xff]
    %v549 = vld [vmem:[#allocation11 + $0x120] sm:$0xff]
    %v550 = vld [vmem:[#allocation11 + $0x128] sm:$0xff]
    %v551 = vld [vmem:[#allocation11 + $0x130] sm:$0xff]
    %v552 = vld [vmem:[#allocation11 + $0x138] sm:$0xff]
    %v553 = vld [vmem:[#allocation11 + $0x140] sm:$0xff]
    %v554 = vld [vmem:[#allocation11 + $0x148] sm:$0xff]
    %v555 = vld [vmem:[#allocation11 + $0x150] sm:$0xff]
    %v556 = vld [vmem:[#allocation11 + $0x158] sm:$0xff]
    %v557 = vld [vmem:[#allocation11 + $0x160] sm:$0xff]
    %v558 = vld [vmem:[#allocation11 + $0x168] sm:$0xff]
    %v559 = vld [vmem:[#allocation11 + $0x170] sm:$0xff]
    %v560 = vld [vmem:[#allocation11 + $0x178] sm:$0xff]
    %v561 = vld [vmem:[#allocation11 + $0x180] sm:$0xff]
    %v562 = vld [vmem:[#allocation11 + $0x188] sm:$0xff]
    %v563 = vld [vmem:[#allocation11 + $0x190] sm:$0xff]
    %v564 = vld [vmem:[#allocation11 + $0x198] sm:$0xff]
    %v565 = vld [vmem:[#allocation11 + $0x1a0] sm:$0xff]
    %v566 = vld [vmem:[#allocation11 + $0x1a8] sm:$0xff]
    %v567 = vld [vmem:[#allocation11 + $0x1b0] sm:$0xff]
    %v568 = vld [vmem:[#allocation11 + $0x1b8] sm:$0xff]
    %v569 = vld [vmem:[#allocation11 + $0x1c0] sm:$0xff]
    %v570 = vld [vmem:[#allocation11 + $0x1c8] sm:$0xff]
    %v571 = vld [vmem:[#allocation11 + $0x1d0] sm:$0xff]
    %v572 = vld [vmem:[#allocation11 + $0x1d8] sm:$0xff]
    %v573 = vld [vmem:[#allocation11 + $0x1e0] sm:$0xff]
    %v574 = vld [vmem:[#allocation11 + $0x1e8] sm:$0xff]
    %v575 = vld [vmem:[#allocation11 + $0x1f0] sm:$0xff]
    %v576 = vld [vmem:[#allocation11 + $0x1f8] sm:$0xff]
    %s577 = smul.u32 0, 4
    %s578 = smul.addr %s577, 8
    %s579 = scalar_lea.vmem [#allocation3], %s578
    %v580 = vld [vmem:[%s579] sm:$0xff]
    %v581 = vld [vmem:[%s579 + $0x8] sm:$0xff]
    %v582 = vld [vmem:[%s579 + $0x10] sm:$0xff]
    %v583 = vld [vmem:[%s579 + $0x18] sm:$0xff]
    %584 = vmatprep.subr.mxu0 %v514
    %585 = vmatpush1.msra.mxu0 %v513
    %586 = vmatprep.subr.mxu0 %v518
    %587 = vmatpush1.msra.mxu0 %v517
    %588 = vmatprep.subr.mxu0 %v522
    %589 = vmatpush1.msra.mxu0 %v521
    %590 = vmatprep.subr.mxu0 %v526
    %591 = vmatpush1.msra.mxu0 %v525
    %592 = vmatprep.subr.mxu0 %v530
    %593 = vmatpush1.msra.mxu0 %v529
    %594 = vmatprep.subr.mxu0 %v534
    %595 = vmatpush1.msra.mxu0 %v533
    %596 = vmatprep.subr.mxu0 %v538
    %597 = vmatpush1.msra.mxu0 %v537
    %598 = vmatprep.subr.mxu0 %v542
    %599 = vmatpush1.msra.mxu0 %v541
    %600 = vmatprep.subr.mxu0 %v546
    %601 = vmatpush1.msra.mxu0 %v545
    %602 = vmatprep.subr.mxu0 %v550
    %603 = vmatpush1.msra.mxu0 %v549
    %604 = vmatprep.subr.mxu0 %v554
    %605 = vmatpush1.msra.mxu0 %v553
    %606 = vmatprep.subr.mxu0 %v558
    %607 = vmatpush1.msra.mxu0 %v557
    %608 = vmatprep.subr.mxu0 %v562
    %609 = vmatpush1.msra.mxu0 %v561
    %610 = vmatprep.subr.mxu0 %v566
    %611 = vmatpush1.msra.mxu0 %v565
    %612 = vmatprep.subr.mxu0 %v570
    %613 = vmatpush1.msra.mxu0 %v569
    %614 = vmatprep.subr.mxu0 %v574
    %615 = vmatpush1.msra.mxu0 %v573
    %616 = vmatprep.subr.mxu0 0.0
    %617 = vmatpush1.msra.mxu0 0.0
    %618 = vmatprep.subr.mxu0 0.0
    %619 = vmatpush1.msra.mxu0 0.0
    %620 = vmatprep.subr.mxu0 0.0
    %621 = vmatpush1.msra.mxu0 0.0
    %622 = vmatprep.subr.mxu0 0.0
    %623 = vmatpush1.msra.mxu0 0.0
    %624 = vmatprep.subr.mxu0 0.0
    %625 = vmatpush1.msra.mxu0 0.0
    %626 = vmatprep.subr.mxu0 0.0
    %627 = vmatpush1.msra.mxu0 0.0
    %628 = vmatprep.subr.mxu0 0.0
    %629 = vmatpush1.msra.mxu0 0.0
    %630 = vmatprep.subr.mxu0 0.0
    %631 = vmatpush1.msra.mxu0 0.0
    %632 = vmatprep.subr.mxu0 0.0
    %633 = vmatpush1.msra.mxu0 0.0
    %634 = vmatprep.subr.mxu0 0.0
    %635 = vmatpush1.msra.mxu0 0.0
    %636 = vmatprep.subr.mxu0 0.0
    %637 = vmatpush1.msra.mxu0 0.0
    %638 = vmatprep.subr.mxu0 0.0
    %639 = vmatpush1.msra.mxu0 0.0
    %640 = vmatprep.subr.mxu0 0.0
    %641 = vmatpush1.msra.mxu0 0.0
    %642 = vmatprep.subr.mxu0 0.0
    %643 = vmatpush1.msra.mxu0 0.0
    %644 = vmatprep.subr.mxu0 0.0
    %645 = vmatpush1.msra.mxu0 0.0
    %646 = vmatprep.subr.mxu0 0.0
    %647 = vmatpush1.msra.mxu0 0.0
    %648 = vmatprep.mubr.f32.mxu0 0.0
    %649 = vmatmul.mubr.f32.gmra.mrb[0].mxu0 0.0
    %v650 = vpop.f32.mrb[0].mxu0
    %v651 = vadd.f32 0.0, %v650
    %v652 = vpop.f32.mrb[0].mxu0
    %v653 = vadd.f32 0.0, %v652
    %654 = vdwg.mxu0
    %655 = vmatprep.subr.mxu0 %v516
    %656 = vmatpush1.msra.mxu0 %v515
    %657 = vmatprep.subr.mxu0 %v520
    %658 = vmatpush1.msra.mxu0 %v519
    %659 = vmatprep.subr.mxu0 %v524
    %660 = vmatpush1.msra.mxu0 %v523
    %661 = vmatprep.subr.mxu0 %v528
    %662 = vmatpush1.msra.mxu0 %v527
    %663 = vmatprep.subr.mxu0 %v532
    %664 = vmatpush1.msra.mxu0 %v531
    %665 = vmatprep.subr.mxu0 %v536
    %666 = vmatpush1.msra.mxu0 %v535
    %667 = vmatprep.subr.mxu0 %v540
    %668 = vmatpush1.msra.mxu0 %v539
    %669 = vmatprep.subr.mxu0 %v544
    %670 = vmatpush1.msra.mxu0 %v543
    %671 = vmatprep.subr.mxu0 %v548
    %672 = vmatpush1.msra.mxu0 %v547
    %673 = vmatprep.subr.mxu0 %v552
    %674 = vmatpush1.msra.mxu0 %v551
    %675 = vmatprep.subr.mxu0 %v556
    %676 = vmatpush1.msra.mxu0 %v555
    %677 = vmatprep.subr.mxu0 %v560
    %678 = vmatpush1.msra.mxu0 %v559
    %679 = vmatprep.subr.mxu0 %v564
    %680 = vmatpush1.msra.mxu0 %v563
    %681 = vmatprep.subr.mxu0 %v568
    %682 = vmatpush1.msra.mxu0 %v567
    %683 = vmatprep.subr.mxu0 %v572
    %684 = vmatpush1.msra.mxu0 %v571
    %685 = vmatprep.subr.mxu0 %v576
    %686 = vmatpush1.msra.mxu0 %v575
    %687 = vmatprep.subr.mxu0 0.0
    %688 = vmatpush1.msra.mxu0 0.0
    %689 = vmatprep.subr.mxu0 0.0
    %690 = vmatpush1.msra.mxu0 0.0
    %691 = vmatprep.subr.mxu0 0.0
    %692 = vmatpush1.msra.mxu0 0.0
    %693 = vmatprep.subr.mxu0 0.0
    %694 = vmatpush1.msra.mxu0 0.0
    %695 = vmatprep.subr.mxu0 0.0
    %696 = vmatpush1.msra.mxu0 0.0
    %697 = vmatprep.subr.mxu0 0.0
    %698 = vmatpush1.msra.mxu0 0.0
    %699 = vmatprep.subr.mxu0 0.0
    %700 = vmatpush1.msra.mxu0 0.0
    %701 = vmatprep.subr.mxu0 0.0
    %702 = vmatpush1.msra.mxu0 0.0
    %703 = vmatprep.subr.mxu0 0.0
    %704 = vmatpush1.msra.mxu0 0.0
    %705 = vmatprep.subr.mxu0 0.0
    %706 = vmatpush1.msra.mxu0 0.0
    %707 = vmatprep.subr.mxu0 0.0
    %708 = vmatpush1.msra.mxu0 0.0
    %709 = vmatprep.subr.mxu0 0.0
    %710 = vmatpush1.msra.mxu0 0.0
    %711 = vmatprep.subr.mxu0 0.0
    %712 = vmatpush1.msra.mxu0 0.0
    %713 = vmatprep.subr.mxu0 0.0
    %714 = vmatpush1.msra.mxu0 0.0
    %715 = vmatprep.subr.mxu0 0.0
    %716 = vmatpush1.msra.mxu0 0.0
    %717 = vmatprep.subr.mxu0 0.0
    %718 = vmatpush1.msra.mxu0 0.0
    %719 = vmatprep.mubr.f32.mxu0 0.0
    %720 = vmatmul.mubr.f32.gmra.mrb[0].mxu0 0.0
    %v721 = vpop.f32.mrb[0].mxu0
    %v722 = vadd.f32 0.0, %v721
    %v723 = vpop.f32.mrb[0].mxu0
    %v724 = vadd.f32 0.0, %v723
    %725 = vdwg.mxu0
    %v726 = vadd.f32 %v580, %v651
    %v727 = vadd.f32 %v581, %v653
    %v728 = vadd.f32 %v582, %v722
    %v729 = vadd.f32 %v583, %v724
    %v730 = vxor.u32 %v726, 2147483648
    %v731 = vmul.f32 %v730, 1.442695
    %v732 = vpow.pop %v731
    %v733 = vadd.f32 %v732, 1.0
    %v734 = vrcp.pop %v733
    %v735 = vmul.f32 1.0, %v734
    %v736 = vxor.u32 %v727, 2147483648
    %v737 = vmul.f32 %v736, 1.442695
    %v738 = vpow.pop %v737
    %v739 = vadd.f32 %v738, 1.0
    %v740 = vrcp.pop %v739
    %v741 = vmul.f32 1.0, %v740
    %v742 = vtanh.pop %v728
    %v743 = vxor.u32 %v729, 2147483648
    %v744 = vmul.f32 %v743, 1.442695
    %v745 = vpow.pop %v744
    %v746 = vadd.f32 %v745, 1.0
    %v747 = vrcp.pop %v746
    %v748 = vmul.f32 1.0, %v747
    %v749 = vmul.f32 %v741, 0.0
    %v750 = vmul.f32 %v735, %v742
    %v751 = vadd.f32 %v749, %v750
    %v752 = vtanh.pop %v751
    %v753 = vmul.f32 %v748, %v752
    %s754 = smul.u32 1, 4
    %s755 = smul.addr %s754, 8
    %s756 = scalar_lea.vmem [#allocation3], %s755
    %v757 = vld [vmem:[%s756] sm:$0xff]
    %v758 = vld [vmem:[%s756 + $0x8] sm:$0xff]
    %v759 = vld [vmem:[%s756 + $0x10] sm:$0xff]
    %v760 = vld [vmem:[%s756 + $0x18] sm:$0xff]
    %761 = vmatprep.subr.mxu0 %v514
    %762 = vmatpush1.msra.mxu0 %v513
    %763 = vmatprep.subr.mxu0 %v518
    %764 = vmatpush1.msra.mxu0 %v517
    %765 = vmatprep.subr.mxu0 %v522
    %766 = vmatpush1.msra.mxu0 %v521
    %767 = vmatprep.subr.mxu0 %v526
    %768 = vmatpush1.msra.mxu0 %v525
    %769 = vmatprep.subr.mxu0 %v530
    %770 = vmatpush1.msra.mxu0 %v529
    %771 = vmatprep.subr.mxu0 %v534
    %772 = vmatpush1.msra.mxu0 %v533
    %773 = vmatprep.subr.mxu0 %v538
    %774 = vmatpush1.msra.mxu0 %v537
    %775 = vmatprep.subr.mxu0 %v542
    %776 = vmatpush1.msra.mxu0 %v541
    %777 = vmatprep.subr.mxu0 %v546
    %778 = vmatpush1.msra.mxu0 %v545
    %779 = vmatprep.subr.mxu0 %v550
    %780 = vmatpush1.msra.mxu0 %v549
    %781 = vmatprep.subr.mxu0 %v554
    %782 = vmatpush1.msra.mxu0 %v553
    %783 = vmatprep.subr.mxu0 %v558
    %784 = vmatpush1.msra.mxu0 %v557
    %785 = vmatprep.subr.mxu0 %v562
    %786 = vmatpush1.msra.mxu0 %v561
    %787 = vmatprep.subr.mxu0 %v566
    %788 = vmatpush1.msra.mxu0 %v565
    %789 = vmatprep.subr.mxu0 %v570
    %790 = vmatpush1.msra.mxu0 %v569
    %791 = vmatprep.subr.mxu0 %v574
    %792 = vmatpush1.msra.mxu0 %v573
    %793 = vmatprep.subr.mxu0 0.0
    %794 = vmatpush1.msra.mxu0 0.0
    %795 = vmatprep.subr.mxu0 0.0
    %796 = vmatpush1.msra.mxu0 0.0
    %797 = vmatprep.subr.mxu0 0.0
    %798 = vmatpush1.msra.mxu0 0.0
    %799 = vmatprep.subr.mxu0 0.0
    %800 = vmatpush1.msra.mxu0 0.0
    %801 = vmatprep.subr.mxu0 0.0
    %802 = vmatpush1.msra.mxu0 0.0
    %803 = vmatprep.subr.mxu0 0.0
    %804 = vmatpush1.msra.mxu0 0.0
    %805 = vmatprep.subr.mxu0 0.0
    %806 = vmatpush1.msra.mxu0 0.0
    %807 = vmatprep.subr.mxu0 0.0
    %808 = vmatpush1.msra.mxu0 0.0
    %809 = vmatprep.subr.mxu0 0.0
    %810 = vmatpush1.msra.mxu0 0.0
    %811 = vmatprep.subr.mxu0 0.0
    %812 = vmatpush1.msra.mxu0 0.0
    %813 = vmatprep.subr.mxu0 0.0
    %814 = vmatpush1.msra.mxu0 0.0
    %815 = vmatprep.subr.mxu0 0.0
    %816 = vmatpush1.msra.mxu0 0.0
    %817 = vmatprep.subr.mxu0 0.0
    %818 = vmatpush1.msra.mxu0 0.0
    %819 = vmatprep.subr.mxu0 0.0
    %820 = vmatpush1.msra.mxu0 0.0
    %821 = vmatprep.subr.mxu0 0.0
    %822 = vmatpush1.msra.mxu0 0.0
    %823 = vmatprep.subr.mxu0 0.0
    %824 = vmatpush1.msra.mxu0 0.0
    %825 = vmatprep.mubr.f32.mxu0 0.0
    %826 = vmatmul.mubr.f32.gmra.mrb[0].mxu0 %v753
    %v827 = vpop.f32.mrb[0].mxu0
    %v828 = vadd.f32 0.0, %v827
    %v829 = vpop.f32.mrb[0].mxu0
    %v830 = vadd.f32 0.0, %v829
    %831 = vdwg.mxu0
    %832 = vmatprep.subr.mxu0 %v516
    %833 = vmatpush1.msra.mxu0 %v515
    %834 = vmatprep.subr.mxu0 %v520
    %835 = vmatpush1.msra.mxu0 %v519
    %836 = vmatprep.subr.mxu0 %v524
    %837 = vmatpush1.msra.mxu0 %v523
    %838 = vmatprep.subr.mxu0 %v528
    %839 = vmatpush1.msra.mxu0 %v527
    %840 = vmatprep.subr.mxu0 %v532
    %841 = vmatpush1.msra.mxu0 %v531
    %842 = vmatprep.subr.mxu0 %v536
    %843 = vmatpush1.msra.mxu0 %v535
    %844 = vmatprep.subr.mxu0 %v540
    %845 = vmatpush1.msra.mxu0 %v539
    %846 = vmatprep.subr.mxu0 %v544
    %847 = vmatpush1.msra.mxu0 %v543
    %848 = vmatprep.subr.mxu0 %v548
    %849 = vmatpush1.msra.mxu0 %v547
    %850 = vmatprep.subr.mxu0 %v552
    %851 = vmatpush1.msra.mxu0 %v551
    %852 = vmatprep.subr.mxu0 %v556
    %853 = vmatpush1.msra.mxu0 %v555
    %854 = vmatprep.subr.mxu0 %v560
    %855 = vmatpush1.msra.mxu0 %v559
    %856 = vmatprep.subr.mxu0 %v564
    %857 = vmatpush1.msra.mxu0 %v563
    %858 = vmatprep.subr.mxu0 %v568
    %859 = vmatpush1.msra.mxu0 %v567
    %860 = vmatprep.subr.mxu0 %v572
    %861 = vmatpush1.msra.mxu0 %v571
    %862 = vmatprep.subr.mxu0 %v576
    %863 = vmatpush1.msra.mxu0 %v575
    %864 = vmatprep.subr.mxu0 0.0
    %865 = vmatpush1.msra.mxu0 0.0
    %866 = vmatprep.subr.mxu0 0.0
    %867 = vmatpush1.msra.mxu0 0.0
    %868 = vmatprep.subr.mxu0 0.0
    %869 = vmatpush1.msra.mxu0 0.0
    %870 = vmatprep.subr.mxu0 0.0
    %871 = vmatpush1.msra.mxu0 0.0
    %872 = vmatprep.subr.mxu0 0.0
    %873 = vmatpush1.msra.mxu0 0.0
    %874 = vmatprep.subr.mxu0 0.0
    %875 = vmatpush1.msra.mxu0 0.0
    %876 = vmatprep.subr.mxu0 0.0
    %877 = vmatpush1.msra.mxu0 0.0
    %878 = vmatprep.subr.mxu0 0.0
    %879 = vmatpush1.msra.mxu0 0.0
    %880 = vmatprep.subr.mxu0 0.0
    %881 = vmatpush1.msra.mxu0 0.0
    %882 = vmatprep.subr.mxu0 0.0
    %883 = vmatpush1.msra.mxu0 0.0
    %884 = vmatprep.subr.mxu0 0.0
    %885 = vmatpush1.msra.mxu0 0.0
    %886 = vmatprep.subr.mxu0 0.0
    %887 = vmatpush1.msra.mxu0 0.0
    %888 = vmatprep.subr.mxu0 0.0
    %889 = vmatpush1.msra.mxu0 0.0
    %890 = vmatprep.subr.mxu0 0.0
    %891 = vmatpush1.msra.mxu0 0.0
    %892 = vmatprep.subr.mxu0 0.0
    %893 = vmatpush1.msra.mxu0 0.0
    %894 = vmatprep.subr.mxu0 0.0
    %895 = vmatpush1.msra.mxu0 0.0
    %896 = vmatprep.mubr.f32.mxu0 0.0
    %897 = vmatmul.mubr.f32.gmra.mrb[0].mxu0 %v753
    %v898 = vpop.f32.mrb[0].mxu0
    %v899 = vadd.f32 0.0, %v898
    %v900 = vpop.f32.mrb[0].mxu0
    %v901 = vadd.f32 0.0, %v900
    %902 = vdwg.mxu0
    %v903 = vadd.f32 %v757, %v828
    %v904 = vadd.f32 %v758, %v830
    %v905 = vadd.f32 %v759, %v899
    %v906 = vadd.f32 %v760, %v901
    %v907 = vxor.u32 %v903, 2147483648
    %v908 = vmul.f32 %v907, 1.442695
    %v909 = vpow.pop %v908
    %v910 = vadd.f32 %v909, 1.0
    %v911 = vrcp.pop %v910
    %v912 = vmul.f32 1.0, %v911
    %v913 = vxor.u32 %v904, 2147483648
    %v914 = vmul.f32 %v913, 1.442695
    %v915 = vpow.pop %v914
    %v916 = vadd.f32 %v915, 1.0
    %v917 = vrcp.pop %v916
    %v918 = vmul.f32 1.0, %v917
    %v919 = vtanh.pop %v905
    %v920 = vxor.u32 %v906, 2147483648
    %v921 = vmul.f32 %v920, 1.442695
    %v922 = vpow.pop %v921
    %v923 = vadd.f32 %v922, 1.0
    %v924 = vrcp.pop %v923
    %v925 = vmul.f32 1.0, %v924
    %v926 = vmul.f32 %v918, %v751
    %v927 = vmul.f32 %v912, %v919
    %v928 = vadd.f32 %v926, %v927
    %v929 = vtanh.pop %v928
    %v930 = vmul.f32 %v925, %v929
    %s931 = smul.u32 2, 4
    %s932 = smul.addr %s931, 8
    %s933 = scalar_lea.vmem [#allocation3], %s932
    %v934 = vld [vmem:[%s933] sm:$0xff]
    %v935 = vld [vmem:[%s933 + $0x8] sm:$0xff]
    %v936 = vld [vmem:[%s933 + $0x10] sm:$0xff]
    %v937 = vld [vmem:[%s933 + $0x18] sm:$0xff]
    %938 = vmatprep.subr.mxu0 %v514
    %939 = vmatpush1.msra.mxu0 %v513
    %940 = vmatprep.subr.mxu0 %v518
    %941 = vmatpush1.msra.mxu0 %v517
    %942 = vmatprep.subr.mxu0 %v522
    %943 = vmatpush1.msra.mxu0 %v521
    %944 = vmatprep.subr.mxu0 %v526
    %945 = vmatpush1.msra.mxu0 %v525
    %946 = vmatprep.subr.mxu0 %v530
    %947 = vmatpush1.msra.mxu0 %v529
    %948 = vmatprep.subr.mxu0 %v534
    %949 = vmatpush1.msra.mxu0 %v533
    %950 = vmatprep.subr.mxu0 %v538
    %951 = vmatpush1.msra.mxu0 %v537
    %952 = vmatprep.subr.mxu0 %v542
    %953 = vmatpush1.msra.mxu0 %v541
    %954 = vmatprep.subr.mxu0 %v546
    %955 = vmatpush1.msra.mxu0 %v545
    %956 = vmatprep.subr.mxu0 %v550
    %957 = vmatpush1.msra.mxu0 %v549
    %958 = vmatprep.subr.mxu0 %v554
    %959 = vmatpush1.msra.mxu0 %v553
    %960 = vmatprep.subr.mxu0 %v558
    %961 = vmatpush1.msra.mxu0 %v557
    %962 = vmatprep.subr.mxu0 %v562
    %963 = vmatpush1.msra.mxu0 %v561
    %964 = vmatprep.subr.mxu0 %v566
    %965 = vmatpush1.msra.mxu0 %v565
    %966 = vmatprep.subr.mxu0 %v570
    %967 = vmatpush1.msra.mxu0 %v569
    %968 = vmatprep.subr.mxu0 %v574
    %969 = vmatpush1.msra.mxu0 %v573
    %970 = vmatprep.subr.mxu0 0.0
    %971 = vmatpush1.msra.mxu0 0.0
    %972 = vmatprep.subr.mxu0 0.0
    %973 = vmatpush1.msra.mxu0 0.0
    %974 = vmatprep.subr.mxu0 0.0
    %975 = vmatpush1.msra.mxu0 0.0
    %976 = vmatprep.subr.mxu0 0.0
    %977 = vmatpush1.msra.mxu0 0.0
    %978 = vmatprep.subr.mxu0 0.0
    %979 = vmatpush1.msra.mxu0 0.0
    %980 = vmatprep.subr.mxu0 0.0
    %981 = vmatpush1.msra.mxu0 0.0
    %982 = vmatprep.subr.mxu0 0.0
    %983 = vmatpush1.msra.mxu0 0.0
    %984 = vmatprep.subr.mxu0 0.0
    %985 = vmatpush1.msra.mxu0 0.0
    %986 = vmatprep.subr.mxu0 0.0
    %987 = vmatpush1.msra.mxu0 0.0
    %988 = vmatprep.subr.mxu0 0.0
    %989 = vmatpush1.msra.mxu0 0.0
    %990 = vmatprep.subr.mxu0 0.0
    %991 = vmatpush1.msra.mxu0 0.0
    %992 = vmatprep.subr.mxu0 0.0
    %993 = vmatpush1.msra.mxu0 0.0
    %994 = vmatprep.subr.mxu0 0.0
    %995 = vmatpush1.msra.mxu0 0.0
    %996 = vmatprep.subr.mxu0 0.0
    %997 = vmatpush1.msra.mxu0 0.0
    %998 = vmatprep.subr.mxu0 0.0
    %999 = vmatpush1.msra.mxu0 0.0
    %1000 = vmatprep.subr.mxu0 0.0
    %1001 = vmatpush1.msra.mxu0 0.0
    %1002 = vmatprep.mubr.f32.mxu0 0.0
    %1003 = vmatmul.mubr.f32.gmra.mrb[0].mxu0 %v930
    %v1004 = vpop.f32.mrb[0].mxu0
    %v1005 = vadd.f32 0.0, %v1004
    %v1006 = vpop.f32.mrb[0].mxu0
    %v1007 = vadd.f32 0.0, %v1006
    %1008 = vdwg.mxu0
    %1009 = vmatprep.subr.mxu0 %v516
    %1010 = vmatpush1.msra.mxu0 %v515
    %1011 = vmatprep.subr.mxu0 %v520
    %1012 = vmatpush1.msra.mxu0 %v519
    %1013 = vmatprep.subr.mxu0 %v524
    %1014 = vmatpush1.msra.mxu0 %v523
    %1015 = vmatprep.subr.mxu0 %v528
    %1016 = vmatpush1.msra.mxu0 %v527
    %1017 = vmatprep.subr.mxu0 %v532
    %1018 = vmatpush1.msra.mxu0 %v531
    %1019 = vmatprep.subr.mxu0 %v536
    %1020 = vmatpush1.msra.mxu0 %v535
    %1021 = vmatprep.subr.mxu0 %v540
    %1022 = vmatpush1.msra.mxu0 %v539
    %1023 = vmatprep.subr.mxu0 %v544
    %1024 = vmatpush1.msra.mxu0 %v543
    %1025 = vmatprep.subr.mxu0 %v548
    %1026 = vmatpush1.msra.mxu0 %v547
    %1027 = vmatprep.subr.mxu0 %v552
    %1028 = vmatpush1.msra.mxu0 %v551
    %1029 = vmatprep.subr.mxu0 %v556
    %1030 = vmatpush1.msra.mxu0 %v555
    %1031 = vmatprep.subr.mxu0 %v560
    %1032 = vmatpush1.msra.mxu0 %v559
    %1033 = vmatprep.subr.mxu0 %v564
    %1034 = vmatpush1.msra.mxu0 %v563
    %1035 = vmatprep.subr.mxu0 %v568
    %1036 = vmatpush1.msra.mxu0 %v567
    %1037 = vmatprep.subr.mxu0 %v572
    %1038 = vmatpush1.msra.mxu0 %v571
    %1039 = vmatprep.subr.mxu0 %v576
    %1040 = vmatpush1.msra.mxu0 %v575
    %1041 = vmatprep.subr.mxu0 0.0
    %1042 = vmatpush1.msra.mxu0 0.0
    %1043 = vmatprep.subr.mxu0 0.0
    %1044 = vmatpush1.msra.mxu0 0.0
    %1045 = vmatprep.subr.mxu0 0.0
    %1046 = vmatpush1.msra.mxu0 0.0
    %1047 = vmatprep.subr.mxu0 0.0
    %1048 = vmatpush1.msra.mxu0 0.0
    %1049 = vmatprep.subr.mxu0 0.0
    %1050 = vmatpush1.msra.mxu0 0.0
    %1051 = vmatprep.subr.mxu0 0.0
    %1052 = vmatpush1.msra.mxu0 0.0
    %1053 = vmatprep.subr.mxu0 0.0
    %1054 = vmatpush1.msra.mxu0 0.0
    %1055 = vmatprep.subr.mxu0 0.0
    %1056 = vmatpush1.msra.mxu0 0.0
    %1057 = vmatprep.subr.mxu0 0.0
    %1058 = vmatpush1.msra.mxu0 0.0
    %1059 = vmatprep.subr.mxu0 0.0
    %1060 = vmatpush1.msra.mxu0 0.0
    %1061 = vmatprep.subr.mxu0 0.0
    %1062 = vmatpush1.msra.mxu0 0.0
    %1063 = vmatprep.subr.mxu0 0.0
    %1064 = vmatpush1.msra.mxu0 0.0
    %1065 = vmatprep.subr.mxu0 0.0
    %1066 = vmatpush1.msra.mxu0 0.0
    %1067 = vmatprep.subr.mxu0 0.0
    %1068 = vmatpush1.msra.mxu0 0.0
    %1069 = vmatprep.subr.mxu0 0.0
    %1070 = vmatpush1.msra.mxu0 0.0
    %1071 = vmatprep.subr.mxu0 0.0
    %1072 = vmatpush1.msra.mxu0 0.0
    %1073 = vmatprep.mubr.f32.mxu0 0.0
    %1074 = vmatmul.mubr.f32.gmra.mrb[0].mxu0 %v930
    %v1075 = vpop.f32.mrb[0].mxu0
    %v1076 = vadd.f32 0.0, %v1075
    %v1077 = vpop.f32.mrb[0].mxu0
    %v1078 = vadd.f32 0.0, %v1077
    %1079 = vdwg.mxu0
    %v1080 = vadd.f32 %v934, %v1005
    %v1081 = vadd.f32 %v935, %v1007
    %v1082 = vadd.f32 %v936, %v1076
    %v1083 = vadd.f32 %v937, %v1078
    %v1084 = vxor.u32 %v1080, 2147483648
    %v1085 = vmul.f32 %v1084, 1.442695
    %v1086 = vpow.pop %v1085
    %v1087 = vadd.f32 %v1086, 1.0
    %v1088 = vrcp.pop %v1087
    %v1089 = vmul.f32 1.0, %v1088
    %v1090 = vxor.u32 %v1081, 2147483648
    %v1091 = vmul.f32 %v1090, 1.442695
    %v1092 = vpow.pop %v1091
    %v1093 = vadd.f32 %v1092, 1.0
    %v1094 = vrcp.pop %v1093
    %v1095 = vmul.f32 1.0, %v1094
    %v1096 = vtanh.pop %v1082
    %v1097 = vxor.u32 %v1083, 2147483648
    %v1098 = vmul.f32 %v1097, 1.442695
    %v1099 = vpow.pop %v1098
    %v1100 = vadd.f32 %v1099, 1.0
    %v1101 = vrcp.pop %v1100
    %v1102 = vmul.f32 1.0, %v1101
    %v1103 = vmul.f32 %v1095, %v928
    %v1104 = vmul.f32 %v1089, %v1096
    %v1105 = vadd.f32 %v1103, %v1104
    %v1106 = vtanh.pop %v1105
    %v1107 = vmul.f32 %v1102, %v1106
    %s1108 = smul.u32 3, 4
    %s1109 = smul.addr %s1108, 8
    %s1110 = scalar_lea.vmem [#allocation3], %s1109
    %v1111 = vld [vmem:[%s1110] sm:$0xff]
    %v1112 = vld [vmem:[%s1110 + $0x8] sm:$0xff]
    %v1113 = vld [vmem:[%s1110 + $0x10] sm:$0xff]
    %v1114 = vld [vmem:[%s1110 + $0x18] sm:$0xff]
    %1115 = vmatprep.subr.mxu0 %v514
    %1116 = vmatpush1.msra.mxu0 %v513
    %1117 = vmatprep.subr.mxu0 %v518
    %1118 = vmatpush1.msra.mxu0 %v517
    %1119 = vmatprep.subr.mxu0 %v522
    %1120 = vmatpush1.msra.mxu0 %v521
    %1121 = vmatprep.subr.mxu0 %v526
    %1122 = vmatpush1.msra.mxu0 %v525
    %1123 = vmatprep.subr.mxu0 %v530
    %1124 = vmatpush1.msra.mxu0 %v529
    %1125 = vmatprep.subr.mxu0 %v534
    %1126 = vmatpush1.msra.mxu0 %v533
    %1127 = vmatprep.subr.mxu0 %v538
    %1128 = vmatpush1.msra.mxu0 %v537
    %1129 = vmatprep.subr.mxu0 %v542
    %1130 = vmatpush1.msra.mxu0 %v541
    %1131 = vmatprep.subr.mxu0 %v546
    %1132 = vmatpush1.msra.mxu0 %v545
    %1133 = vmatprep.subr.mxu0 %v550
    %1134 = vmatpush1.msra.mxu0 %v549
    %1135 = vmatprep.subr.mxu0 %v554
    %1136 = vmatpush1.msra.mxu0 %v553
    %1137 = vmatprep.subr.mxu0 %v558
    %1138 = vmatpush1.msra.mxu0 %v557
    %1139 = vmatprep.subr.mxu0 %v562
    %1140 = vmatpush1.msra.mxu0 %v561
    %1141 = vmatprep.subr.mxu0 %v566
    %1142 = vmatpush1.msra.mxu0 %v565
    %1143 = vmatprep.subr.mxu0 %v570
    %1144 = vmatpush1.msra.mxu0 %v569
    %1145 = vmatprep.subr.mxu0 %v574
    %1146 = vmatpush1.msra.mxu0 %v573
    %1147 = vmatprep.subr.mxu0 0.0
    %1148 = vmatpush1.msra.mxu0 0.0
    %1149 = vmatprep.subr.mxu0 0.0
    %1150 = vmatpush1.msra.mxu0 0.0
    %1151 = vmatprep.subr.mxu0 0.0
    %1152 = vmatpush1.msra.mxu0 0.0
    %1153 = vmatprep.subr.mxu0 0.0
    %1154 = vmatpush1.msra.mxu0 0.0
    %1155 = vmatprep.subr.mxu0 0.0
    %1156 = vmatpush1.msra.mxu0 0.0
    %1157 = vmatprep.subr.mxu0 0.0
    %1158 = vmatpush1.msra.mxu0 0.0
    %1159 = vmatprep.subr.mxu0 0.0
    %1160 = vmatpush1.msra.mxu0 0.0
    %1161 = vmatprep.subr.mxu0 0.0
    %1162 = vmatpush1.msra.mxu0 0.0
    %1163 = vmatprep.subr.mxu0 0.0
    %1164 = vmatpush1.msra.mxu0 0.0
    %1165 = vmatprep.subr.mxu0 0.0
    %1166 = vmatpush1.msra.mxu0 0.0
    %1167 = vmatprep.subr.mxu0 0.0
    %1168 = vmatpush1.msra.mxu0 0.0
    %1169 = vmatprep.subr.mxu0 0.0
    %1170 = vmatpush1.msra.mxu0 0.0
    %1171 = vmatprep.subr.mxu0 0.0
    %1172 = vmatpush1.msra.mxu0 0.0
    %1173 = vmatprep.subr.mxu0 0.0
    %1174 = vmatpush1.msra.mxu0 0.0
    %1175 = vmatprep.subr.mxu0 0.0
    %1176 = vmatpush1.msra.mxu0 0.0
    %1177 = vmatprep.subr.mxu0 0.0
    %1178 = vmatpush1.msra.mxu0 0.0
    %1179 = vmatprep.mubr.f32.mxu0 0.0
    %1180 = vmatmul.mubr.f32.gmra.mrb[0].mxu0 %v1107
    %v1181 = vpop.f32.mrb[0].mxu0
    %v1182 = vadd.f32 0.0, %v1181
    %v1183 = vpop.f32.mrb[0].mxu0
    %v1184 = vadd.f32 0.0, %v1183
    %1185 = vdwg.mxu0
    %1186 = vmatprep.subr.mxu0 %v516
    %1187 = vmatpush1.msra.mxu0 %v515
    %1188 = vmatprep.subr.mxu0 %v520
    %1189 = vmatpush1.msra.mxu0 %v519
    %1190 = vmatprep.subr.mxu0 %v524
    %1191 = vmatpush1.msra.mxu0 %v523
    %1192 = vmatprep.subr.mxu0 %v528
    %1193 = vmatpush1.msra.mxu0 %v527
    %1194 = vmatprep.subr.mxu0 %v532
    %1195 = vmatpush1.msra.mxu0 %v531
    %1196 = vmatprep.subr.mxu0 %v536
    %1197 = vmatpush1.msra.mxu0 %v535
    %1198 = vmatprep.subr.mxu0 %v540
    %1199 = vmatpush1.msra.mxu0 %v539
    %1200 = vmatprep.subr.mxu0 %v544
    %1201 = vmatpush1.msra.mxu0 %v543
    %1202 = vmatprep.subr.mxu0 %v548
    %1203 = vmatpush1.msra.mxu0 %v547
    %1204 = vmatprep.subr.mxu0 %v552
    %1205 = vmatpush1.msra.mxu0 %v551
    %1206 = vmatprep.subr.mxu0 %v556
    %1207 = vmatpush1.msra.mxu0 %v555
    %1208 = vmatprep.subr.mxu0 %v560
    %1209 = vmatpush1.msra.mxu0 %v559
    %1210 = vmatprep.subr.mxu0 %v564
    %1211 = vmatpush1.msra.mxu0 %v563
    %1212 = vmatprep.subr.mxu0 %v568
    %1213 = vmatpush1.msra.mxu0 %v567
    %1214 = vmatprep.subr.mxu0 %v572
    %1215 = vmatpush1.msra.mxu0 %v571
    %1216 = vmatprep.subr.mxu0 %v576
    %1217 = vmatpush1.msra.mxu0 %v575
    %1218 = vmatprep.subr.mxu0 0.0
    %1219 = vmatpush1.msra.mxu0 0.0
    %1220 = vmatprep.subr.mxu0 0.0
    %1221 = vmatpush1.msra.mxu0 0.0
    %1222 = vmatprep.subr.mxu0 0.0
    %1223 = vmatpush1.msra.mxu0 0.0
    %1224 = vmatprep.subr.mxu0 0.0
    %1225 = vmatpush1.msra.mxu0 0.0
    %1226 = vmatprep.subr.mxu0 0.0
    %1227 = vmatpush1.msra.mxu0 0.0
    %1228 = vmatprep.subr.mxu0 0.0
    %1229 = vmatpush1.msra.mxu0 0.0
    %1230 = vmatprep.subr.mxu0 0.0
    %1231 = vmatpush1.msra.mxu0 0.0
    %1232 = vmatprep.subr.mxu0 0.0
    %1233 = vmatpush1.msra.mxu0 0.0
    %1234 = vmatprep.subr.mxu0 0.0
    %1235 = vmatpush1.msra.mxu0 0.0
    %1236 = vmatprep.subr.mxu0 0.0
    %1237 = vmatpush1.msra.mxu0 0.0
    %1238 = vmatprep.subr.mxu0 0.0
    %1239 = vmatpush1.msra.mxu0 0.0
    %1240 = vmatprep.subr.mxu0 0.0
    %1241 = vmatpush1.msra.mxu0 0.0
    %1242 = vmatprep.subr.mxu0 0.0
    %1243 = vmatpush1.msra.mxu0 0.0
    %1244 = vmatprep.subr.mxu0 0.0
    %1245 = vmatpush1.msra.mxu0 0.0
    %1246 = vmatprep.subr.mxu0 0.0
    %1247 = vmatpush1.msra.mxu0 0.0
    %1248 = vmatprep.subr.mxu0 0.0
    %1249 = vmatpush1.msra.mxu0 0.0
    %1250 = vmatprep.mubr.f32.mxu0 0.0
    %1251 = vmatmul.mubr.f32.gmra.mrb[0].mxu0 %v1107
    %v1252 = vpop.f32.mrb[0].mxu0
    %v1253 = vadd.f32 0.0, %v1252
    %v1254 = vpop.f32.mrb[0].mxu0
    %v1255 = vadd.f32 0.0, %v1254
    %1256 = vdwg.mxu0
    %v1257 = vadd.f32 %v1111, %v1182
    %v1258 = vadd.f32 %v1112, %v1184
    %v1259 = vadd.f32 %v1113, %v1253
    %v1260 = vadd.f32 %v1114, %v1255
    %v1261 = vxor.u32 %v1257, 2147483648
    %v1262 = vmul.f32 %v1261, 1.442695
    %v1263 = vpow.pop %v1262
    %v1264 = vadd.f32 %v1263, 1.0
    %v1265 = vrcp.pop %v1264
    %v1266 = vmul.f32 1.0, %v1265
    %v1267 = vxor.u32 %v1258, 2147483648
    %v1268 = vmul.f32 %v1267, 1.442695
    %v1269 = vpow.pop %v1268
    %v1270 = vadd.f32 %v1269, 1.0
    %v1271 = vrcp.pop %v1270
    %v1272 = vmul.f32 1.0, %v1271
    %v1273 = vtanh.pop %v1259
    %v1274 = vxor.u32 %v1260, 2147483648
    %v1275 = vmul.f32 %v1274, 1.442695
    %v1276 = vpow.pop %v1275
    %v1277 = vadd.f32 %v1276, 1.0
    %v1278 = vrcp.pop %v1277
    %v1279 = vmul.f32 1.0, %v1278
    %v1280 = vmul.f32 %v1272, %v1105
    %v1281 = vmul.f32 %v1266, %v1273
    %v1282 = vadd.f32 %v1280, %v1281
    %v1283 = vtanh.pop %v1282
    %v1284 = vmul.f32 %v1279, %v1283
    %s1285 = smul.u32 4, 4
    %s1286 = smul.addr %s1285, 8
    %s1287 = scalar_lea.vmem [#allocation3], %s1286
    %v1288 = vld [vmem:[%s1287] sm:$0xff]
    %v1289 = vld [vmem:[%s1287 + $0x8] sm:$0xff]
    %v1290 = vld [vmem:[%s1287 + $0x10] sm:$0xff]
    %v1291 = vld [vmem:[%s1287 + $0x18] sm:$0xff]
    %1292 = vmatprep.subr.mxu0 %v514
    %1293 = vmatpush1.msra.mxu0 %v513
    %1294 = vmatprep.subr.mxu0 %v518
    %1295 = vmatpush1.msra.mxu0 %v517
    %1296 = vmatprep.subr.mxu0 %v522
    %1297 = vmatpush1.msra.mxu0 %v521
    %1298 = vmatprep.subr.mxu0 %v526
    %1299 = vmatpush1.msra.mxu0 %v525
    %1300 = vmatprep.subr.mxu0 %v530
    %1301 = vmatpush1.msra.mxu0 %v529
    %1302 = vmatprep.subr.mxu0 %v534
    %1303 = vmatpush1.msra.mxu0 %v533
    %1304 = vmatprep.subr.mxu0 %v538
    %1305 = vmatpush1.msra.mxu0 %v537
    %1306 = vmatprep.subr.mxu0 %v542
    %1307 = vmatpush1.msra.mxu0 %v541
    %1308 = vmatprep.subr.mxu0 %v546
    %1309 = vmatpush1.msra.mxu0 %v545
    %1310 = vmatprep.subr.mxu0 %v550
    %1311 = vmatpush1.msra.mxu0 %v549
    %1312 = vmatprep.subr.mxu0 %v554
    %1313 = vmatpush1.msra.mxu0 %v553
    %1314 = vmatprep.subr.mxu0 %v558
    %1315 = vmatpush1.msra.mxu0 %v557
    %1316 = vmatprep.subr.mxu0 %v562
    %1317 = vmatpush1.msra.mxu0 %v561
    %1318 = vmatprep.subr.mxu0 %v566
    %1319 = vmatpush1.msra.mxu0 %v565
    %1320 = vmatprep.subr.mxu0 %v570
    %1321 = vmatpush1.msra.mxu0 %v569
    %1322 = vmatprep.subr.mxu0 %v574
    %1323 = vmatpush1.msra.mxu0 %v573
    %1324 = vmatprep.subr.mxu0 0.0
    %1325 = vmatpush1.msra.mxu0 0.0
    %1326 = vmatprep.subr.mxu0 0.0
    %1327 = vmatpush1.msra.mxu0 0.0
    %1328 = vmatprep.subr.mxu0 0.0
    %1329 = vmatpush1.msra.mxu0 0.0
    %1330 = vmatprep.subr.mxu0 0.0
    %1331 = vmatpush1.msra.mxu0 0.0
    %1332 = vmatprep.subr.mxu0 0.0
    %1333 = vmatpush1.msra.mxu0 0.0
    %1334 = vmatprep.subr.mxu0 0.0
    %1335 = vmatpush1.msra.mxu0 0.0
    %1336 = vmatprep.subr.mxu0 0.0
    %1337 = vmatpush1.msra.mxu0 0.0
    %1338 = vmatprep.subr.mxu0 0.0
    %1339 = vmatpush1.msra.mxu0 0.0
    %1340 = vmatprep.subr.mxu0 0.0
    %1341 = vmatpush1.msra.mxu0 0.0
    %1342 = vmatprep.subr.mxu0 0.0
    %1343 = vmatpush1.msra.mxu0 0.0
    %1344 = vmatprep.subr.mxu0 0.0
    %1345 = vmatpush1.msra.mxu0 0.0
    %1346 = vmatprep.subr.mxu0 0.0
    %1347 = vmatpush1.msra.mxu0 0.0
    %1348 = vmatprep.subr.mxu0 0.0
    %1349 = vmatpush1.msra.mxu0 0.0
    %1350 = vmatprep.subr.mxu0 0.0
    %1351 = vmatpush1.msra.mxu0 0.0
    %1352 = vmatprep.subr.mxu0 0.0
    %1353 = vmatpush1.msra.mxu0 0.0
    %1354 = vmatprep.subr.mxu0 0.0
    %1355 = vmatpush1.msra.mxu0 0.0
    %1356 = vmatprep.mubr.f32.mxu0 0.0
    %1357 = vmatmul.mubr.f32.gmra.mrb[0].mxu0 %v1284
    %v1358 = vpop.f32.mrb[0].mxu0
    %v1359 = vadd.f32 0.0, %v1358
    %v1360 = vpop.f32.mrb[0].mxu0
    %v1361 = vadd.f32 0.0, %v1360
    %1362 = vdwg.mxu0
    %1363 = vmatprep.subr.mxu0 %v516
    %1364 = vmatpush1.msra.mxu0 %v515
    %1365 = vmatprep.subr.mxu0 %v520
    %1366 = vmatpush1.msra.mxu0 %v519
    %1367 = vmatprep.subr.mxu0 %v524
    %1368 = vmatpush1.msra.mxu0 %v523
    %1369 = vmatprep.subr.mxu0 %v528
    %1370 = vmatpush1.msra.mxu0 %v527
    %1371 = vmatprep.subr.mxu0 %v532
    %1372 = vmatpush1.msra.mxu0 %v531
    %1373 = vmatprep.subr.mxu0 %v536
    %1374 = vmatpush1.msra.mxu0 %v535
    %1375 = vmatprep.subr.mxu0 %v540
    %1376 = vmatpush1.msra.mxu0 %v539
    %1377 = vmatprep.subr.mxu0 %v544
    %1378 = vmatpush1.msra.mxu0 %v543
    %1379 = vmatprep.subr.mxu0 %v548
    %1380 = vmatpush1.msra.mxu0 %v547
    %1381 = vmatprep.subr.mxu0 %v552
    %1382 = vmatpush1.msra.mxu0 %v551
    %1383 = vmatprep.subr.mxu0 %v556
    %1384 = vmatpush1.msra.mxu0 %v555
    %1385 = vmatprep.subr.mxu0 %v560
    %1386 = vmatpush1.msra.mxu0 %v559
    %1387 = vmatprep.subr.mxu0 %v564
    %1388 = vmatpush1.msra.mxu0 %v563
    %1389 = vmatprep.subr.mxu0 %v568
    %1390 = vmatpush1.msra.mxu0 %v567
    %1391 = vmatprep.subr.mxu0 %v572
    %1392 = vmatpush1.msra.mxu0 %v571
    %1393 = vmatprep.subr.mxu0 %v576
    %1394 = vmatpush1.msra.mxu0 %v575
    %1395 = vmatprep.subr.mxu0 0.0
    %1396 = vmatpush1.msra.mxu0 0.0
    %1397 = vmatprep.subr.mxu0 0.0
    %1398 = vmatpush1.msra.mxu0 0.0
    %1399 = vmatprep.subr.mxu0 0.0
    %1400 = vmatpush1.msra.mxu0 0.0
    %1401 = vmatprep.subr.mxu0 0.0
    %1402 = vmatpush1.msra.mxu0 0.0
    %1403 = vmatprep.subr.mxu0 0.0
    %1404 = vmatpush1.msra.mxu0 0.0
    %1405 = vmatprep.subr.mxu0 0.0
    %1406 = vmatpush1.msra.mxu0 0.0
    %1407 = vmatprep.subr.mxu0 0.0
    %1408 = vmatpush1.msra.mxu0 0.0
    %1409 = vmatprep.subr.mxu0 0.0
    %1410 = vmatpush1.msra.mxu0 0.0
    %1411 = vmatprep.subr.mxu0 0.0
    %1412 = vmatpush1.msra.mxu0 0.0
    %1413 = vmatprep.subr.mxu0 0.0
    %1414 = vmatpush1.msra.mxu0 0.0
    %1415 = vmatprep.subr.mxu0 0.0
    %1416 = vmatpush1.msra.mxu0 0.0
    %1417 = vmatprep.subr.mxu0 0.0
    %1418 = vmatpush1.msra.mxu0 0.0
    %1419 = vmatprep.subr.mxu0 0.0
    %1420 = vmatpush1.msra.mxu0 0.0
    %1421 = vmatprep.subr.mxu0 0.0
    %1422 = vmatpush1.msra.mxu0 0.0
    %1423 = vmatprep.subr.mxu0 0.0
    %1424 = vmatpush1.msra.mxu0 0.0
    %1425 = vmatprep.subr.mxu0 0.0
    %1426 = vmatpush1.msra.mxu0 0.0
    %1427 = vmatprep.mubr.f32.mxu0 0.0
    %1428 = vmatmul.mubr.f32.gmra.mrb[0].mxu0 %v1284
    %v1429 = vpop.f32.mrb[0].mxu0
    %v1430 = vadd.f32 0.0, %v1429
    %v1431 = vpop.f32.mrb[0].mxu0
    %v1432 = vadd.f32 0.0, %v1431
    %1433 = vdwg.mxu0
    %v1434 = vadd.f32 %v1288, %v1359
    %v1435 = vadd.f32 %v1289, %v1361
    %v1436 = vadd.f32 %v1290, %v1430
    %v1437 = vadd.f32 %v1291, %v1432
    %v1438 = vxor.u32 %v1434, 2147483648
    %v1439 = vmul.f32 %v1438, 1.442695
    %v1440 = vpow.pop %v1439
    %v1441 = vadd.f32 %v1440, 1.0
    %v1442 = vrcp.pop %v1441
    %v1443 = vmul.f32 1.0, %v1442
    %v1444 = vxor.u32 %v1435, 2147483648
    %v1445 = vmul.f32 %v1444, 1.442695
    %v1446 = vpow.pop %v1445
    %v1447 = vadd.f32 %v1446, 1.0
    %v1448 = vrcp.pop %v1447
    %v1449 = vmul.f32 1.0, %v1448
    %v1450 = vtanh.pop %v1436
    %v1451 = vxor.u32 %v1437, 2147483648
    %v1452 = vmul.f32 %v1451, 1.442695
    %v1453 = vpow.pop %v1452
    %v1454 = vadd.f32 %v1453, 1.0
    %v1455 = vrcp.pop %v1454
    %v1456 = vmul.f32 1.0, %v1455
    %v1457 = vmul.f32 %v1449, %v1282
    %v1458 = vmul.f32 %v1443, %v1450
    %v1459 = vadd.f32 %v1457, %v1458
    %v1460 = vtanh.pop %v1459
    %v1461 = vmul.f32 %v1456, %v1460
    %s1462 = smul.u32 5, 4
    %s1463 = smul.addr %s1462, 8
    %s1464 = scalar_lea.vmem [#allocation3], %s1463
    %v1465 = vld [vmem:[%s1464] sm:$0xff]
    %v1466 = vld [vmem:[%s1464 + $0x8] sm:$0xff]
    %v1467 = vld [vmem:[%s1464 + $0x10] sm:$0xff]
    %v1468 = vld [vmem:[%s1464 + $0x18] sm:$0xff]
    %1469 = vmatprep.subr.mxu0 %v514
    %1470 = vmatpush1.msra.mxu0 %v513
    %1471 = vmatprep.subr.mxu0 %v518
    %1472 = vmatpush1.msra.mxu0 %v517
    %1473 = vmatprep.subr.mxu0 %v522
    %1474 = vmatpush1.msra.mxu0 %v521
    %1475 = vmatprep.subr.mxu0 %v526
    %1476 = vmatpush1.msra.mxu0 %v525
    %1477 = vmatprep.subr.mxu0 %v530
    %1478 = vmatpush1.msra.mxu0 %v529
    %1479 = vmatprep.subr.mxu0 %v534
    %1480 = vmatpush1.msra.mxu0 %v533
    %1481 = vmatprep.subr.mxu0 %v538
    %1482 = vmatpush1.msra.mxu0 %v537
    %1483 = vmatprep.subr.mxu0 %v542
    %1484 = vmatpush1.msra.mxu0 %v541
    %1485 = vmatprep.subr.mxu0 %v546
    %1486 = vmatpush1.msra.mxu0 %v545
    %1487 = vmatprep.subr.mxu0 %v550
    %1488 = vmatpush1.msra.mxu0 %v549
    %1489 = vmatprep.subr.mxu0 %v554
    %1490 = vmatpush1.msra.mxu0 %v553
    %1491 = vmatprep.subr.mxu0 %v558
    %1492 = vmatpush1.msra.mxu0 %v557
    %1493 = vmatprep.subr.mxu0 %v562
    %1494 = vmatpush1.msra.mxu0 %v561
    %1495 = vmatprep.subr.mxu0 %v566
    %1496 = vmatpush1.msra.mxu0 %v565
    %1497 = vmatprep.subr.mxu0 %v570
    %1498 = vmatpush1.msra.mxu0 %v569
    %1499 = vmatprep.subr.mxu0 %v574
    %1500 = vmatpush1.msra.mxu0 %v573
    %1501 = vmatprep.subr.mxu0 0.0
    %1502 = vmatpush1.msra.mxu0 0.0
    %1503 = vmatprep.subr.mxu0 0.0
    %1504 = vmatpush1.msra.mxu0 0.0
    %1505 = vmatprep.subr.mxu0 0.0
    %1506 = vmatpush1.msra.mxu0 0.0
    %1507 = vmatprep.subr.mxu0 0.0
    %1508 = vmatpush1.msra.mxu0 0.0
    %1509 = vmatprep.subr.mxu0 0.0
    %1510 = vmatpush1.msra.mxu0 0.0
    %1511 = vmatprep.subr.mxu0 0.0
    %1512 = vmatpush1.msra.mxu0 0.0
    %1513 = vmatprep.subr.mxu0 0.0
    %1514 = vmatpush1.msra.mxu0 0.0
    %1515 = vmatprep.subr.mxu0 0.0
    %1516 = vmatpush1.msra.mxu0 0.0
    %1517 = vmatprep.subr.mxu0 0.0
    %1518 = vmatpush1.msra.mxu0 0.0
    %1519 = vmatprep.subr.mxu0 0.0
    %1520 = vmatpush1.msra.mxu0 0.0
    %1521 = vmatprep.subr.mxu0 0.0
    %1522 = vmatpush1.msra.mxu0 0.0
    %1523 = vmatprep.subr.mxu0 0.0
    %1524 = vmatpush1.msra.mxu0 0.0
    %1525 = vmatprep.subr.mxu0 0.0
    %1526 = vmatpush1.msra.mxu0 0.0
    %1527 = vmatprep.subr.mxu0 0.0
    %1528 = vmatpush1.msra.mxu0 0.0
    %1529 = vmatprep.subr.mxu0 0.0
    %1530 = vmatpush1.msra.mxu0 0.0
    %1531 = vmatprep.subr.mxu0 0.0
    %1532 = vmatpush1.msra.mxu0 0.0
    %1533 = vmatprep.mubr.f32.mxu0 0.0
    %1534 = vmatmul.mubr.f32.gmra.mrb[0].mxu0 %v1461
    %v1535 = vpop.f32.mrb[0].mxu0
    %v1536 = vadd.f32 0.0, %v1535
    %v1537 = vpop.f32.mrb[0].mxu0
    %v1538 = vadd.f32 0.0, %v1537
    %1539 = vdwg.mxu0
    %1540 = vmatprep.subr.mxu0 %v516
    %1541 = vmatpush1.msra.mxu0 %v515
    %1542 = vmatprep.subr.mxu0 %v520
    %1543 = vmatpush1.msra.mxu0 %v519
    %1544 = vmatprep.subr.mxu0 %v524
    %1545 = vmatpush1.msra.mxu0 %v523
    %1546 = vmatprep.subr.mxu0 %v528
    %1547 = vmatpush1.msra.mxu0 %v527
    %1548 = vmatprep.subr.mxu0 %v532
    %1549 = vmatpush1.msra.mxu0 %v531
    %1550 = vmatprep.subr.mxu0 %v536
    %1551 = vmatpush1.msra.mxu0 %v535
    %1552 = vmatprep.subr.mxu0 %v540
    %1553 = vmatpush1.msra.mxu0 %v539
    %1554 = vmatprep.subr.mxu0 %v544
    %1555 = vmatpush1.msra.mxu0 %v543
    %1556 = vmatprep.subr.mxu0 %v548
    %1557 = vmatpush1.msra.mxu0 %v547
    %1558 = vmatprep.subr.mxu0 %v552
    %1559 = vmatpush1.msra.mxu0 %v551
    %1560 = vmatprep.subr.mxu0 %v556
    %1561 = vmatpush1.msra.mxu0 %v555
    %1562 = vmatprep.subr.mxu0 %v560
    %1563 = vmatpush1.msra.mxu0 %v559
    %1564 = vmatprep.subr.mxu0 %v564
    %1565 = vmatpush1.msra.mxu0 %v563
    %1566 = vmatprep.subr.mxu0 %v568
    %1567 = vmatpush1.msra.mxu0 %v567
    %1568 = vmatprep.subr.mxu0 %v572
    %1569 = vmatpush1.msra.mxu0 %v571
    %1570 = vmatprep.subr.mxu0 %v576
    %1571 = vmatpush1.msra.mxu0 %v575
    %1572 = vmatprep.subr.mxu0 0.0
    %1573 = vmatpush1.msra.mxu0 0.0
    %1574 = vmatprep.subr.mxu0 0.0
    %1575 = vmatpush1.msra.mxu0 0.0
    %1576 = vmatprep.subr.mxu0 0.0
    %1577 = vmatpush1.msra.mxu0 0.0
    %1578 = vmatprep.subr.mxu0 0.0
    %1579 = vmatpush1.msra.mxu0 0.0
    %1580 = vmatprep.subr.mxu0 0.0
    %1581 = vmatpush1.msra.mxu0 0.0
    %1582 = vmatprep.subr.mxu0 0.0
    %1583 = vmatpush1.msra.mxu0 0.0
    %1584 = vmatprep.subr.mxu0 0.0
    %1585 = vmatpush1.msra.mxu0 0.0
    %1586 = vmatprep.subr.mxu0 0.0
    %1587 = vmatpush1.msra.mxu0 0.0
    %1588 = vmatprep.subr.mxu0 0.0
    %1589 = vmatpush1.msra.mxu0 0.0
    %1590 = vmatprep.subr.mxu0 0.0
    %1591 = vmatpush1.msra.mxu0 0.0
    %1592 = vmatprep.subr.mxu0 0.0
    %1593 = vmatpush1.msra.mxu0 0.0
    %1594 = vmatprep.subr.mxu0 0.0
    %1595 = vmatpush1.msra.mxu0 0.0
    %1596 = vmatprep.subr.mxu0 0.0
    %1597 = vmatpush1.msra.mxu0 0.0
    %1598 = vmatprep.subr.mxu0 0.0
    %1599 = vmatpush1.msra.mxu0 0.0
    %1600 = vmatprep.subr.mxu0 0.0
    %1601 = vmatpush1.msra.mxu0 0.0
    %1602 = vmatprep.subr.mxu0 0.0
    %1603 = vmatpush1.msra.mxu0 0.0
    %1604 = vmatprep.mubr.f32.mxu0 0.0
    %1605 = vmatmul.mubr.f32.gmra.mrb[0].mxu0 %v1461
    %v1606 = vpop.f32.mrb[0].mxu0
    %v1607 = vadd.f32 0.0, %v1606
    %v1608 = vpop.f32.mrb[0].mxu0
    %v1609 = vadd.f32 0.0, %v1608
    %1610 = vdwg.mxu0
    %v1611 = vadd.f32 %v1465, %v1536
    %v1612 = vadd.f32 %v1466, %v1538
    %v1613 = vadd.f32 %v1467, %v1607
    %v1614 = vadd.f32 %v1468, %v1609
    %v1615 = vxor.u32 %v1611, 2147483648
    %v1616 = vmul.f32 %v1615, 1.442695
    %v1617 = vpow.pop %v1616
    %v1618 = vadd.f32 %v1617, 1.0
    %v1619 = vrcp.pop %v1618
    %v1620 = vmul.f32 1.0, %v1619
    %v1621 = vxor.u32 %v1612, 2147483648
    %v1622 = vmul.f32 %v1621, 1.442695
    %v1623 = vpow.pop %v1622
    %v1624 = vadd.f32 %v1623, 1.0
    %v1625 = vrcp.pop %v1624
    %v1626 = vmul.f32 1.0, %v1625
    %v1627 = vtanh.pop %v1613
    %v1628 = vxor.u32 %v1614, 2147483648
    %v1629 = vmul.f32 %v1628, 1.442695
    %v1630 = vpow.pop %v1629
    %v1631 = vadd.f32 %v1630, 1.0
    %v1632 = vrcp.pop %v1631
    %v1633 = vmul.f32 1.0, %v1632
    %v1634 = vmul.f32 %v1626, %v1459
    %v1635 = vmul.f32 %v1620, %v1627
    %v1636 = vadd.f32 %v1634, %v1635
    %v1637 = vtanh.pop %v1636
    %v1638 = vmul.f32 %v1633, %v1637
    %s1639 = smul.u32 6, 4
    %s1640 = smul.addr %s1639, 8
    %s1641 = scalar_lea.vmem [#allocation3], %s1640
    %v1642 = vld [vmem:[%s1641] sm:$0xff]
    %v1643 = vld [vmem:[%s1641 + $0x8] sm:$0xff]
    %v1644 = vld [vmem:[%s1641 + $0x10] sm:$0xff]
    %v1645 = vld [vmem:[%s1641 + $0x18] sm:$0xff]
    %1646 = vmatprep.subr.mxu0 %v514
    %1647 = vmatpush1.msra.mxu0 %v513
    %1648 = vmatprep.subr.mxu0 %v518
    %1649 = vmatpush1.msra.mxu0 %v517
    %1650 = vmatprep.subr.mxu0 %v522
    %1651 = vmatpush1.msra.mxu0 %v521
    %1652 = vmatprep.subr.mxu0 %v526
    %1653 = vmatpush1.msra.mxu0 %v525
    %1654 = vmatprep.subr.mxu0 %v530
    %1655 = vmatpush1.msra.mxu0 %v529
    %1656 = vmatprep.subr.mxu0 %v534
    %1657 = vmatpush1.msra.mxu0 %v533
    %1658 = vmatprep.subr.mxu0 %v538
    %1659 = vmatpush1.msra.mxu0 %v537
    %1660 = vmatprep.subr.mxu0 %v542
    %1661 = vmatpush1.msra.mxu0 %v541
    %1662 = vmatprep.subr.mxu0 %v546
    %1663 = vmatpush1.msra.mxu0 %v545
    %1664 = vmatprep.subr.mxu0 %v550
    %1665 = vmatpush1.msra.mxu0 %v549
    %1666 = vmatprep.subr.mxu0 %v554
    %1667 = vmatpush1.msra.mxu0 %v553
    %1668 = vmatprep.subr.mxu0 %v558
    %1669 = vmatpush1.msra.mxu0 %v557
    %1670 = vmatprep.subr.mxu0 %v562
    %1671 = vmatpush1.msra.mxu0 %v561
    %1672 = vmatprep.subr.mxu0 %v566
    %1673 = vmatpush1.msra.mxu0 %v565
    %1674 = vmatprep.subr.mxu0 %v570
    %1675 = vmatpush1.msra.mxu0 %v569
    %1676 = vmatprep.subr.mxu0 %v574
    %1677 = vmatpush1.msra.mxu0 %v573
    %1678 = vmatprep.subr.mxu0 0.0
    %1679 = vmatpush1.msra.mxu0 0.0
    %1680 = vmatprep.subr.mxu0 0.0
    %1681 = vmatpush1.msra.mxu0 0.0
    %1682 = vmatprep.subr.mxu0 0.0
    %1683 = vmatpush1.msra.mxu0 0.0
    %1684 = vmatprep.subr.mxu0 0.0
    %1685 = vmatpush1.msra.mxu0 0.0
    %1686 = vmatprep.subr.mxu0 0.0
    %1687 = vmatpush1.msra.mxu0 0.0
    %1688 = vmatprep.subr.mxu0 0.0
    %1689 = vmatpush1.msra.mxu0 0.0
    %1690 = vmatprep.subr.mxu0 0.0
    %1691 = vmatpush1.msra.mxu0 0.0
    %1692 = vmatprep.subr.mxu0 0.0
    %1693 = vmatpush1.msra.mxu0 0.0
    %1694 = vmatprep.subr.mxu0 0.0
    %1695 = vmatpush1.msra.mxu0 0.0
    %1696 = vmatprep.subr.mxu0 0.0
    %1697 = vmatpush1.msra.mxu0 0.0
    %1698 = vmatprep.subr.mxu0 0.0
    %1699 = vmatpush1.msra.mxu0 0.0
    %1700 = vmatprep.subr.mxu0 0.0
    %1701 = vmatpush1.msra.mxu0 0.0
    %1702 = vmatprep.subr.mxu0 0.0
    %1703 = vmatpush1.msra.mxu0 0.0
    %1704 = vmatprep.subr.mxu0 0.0
    %1705 = vmatpush1.msra.mxu0 0.0
    %1706 = vmatprep.subr.mxu0 0.0
    %1707 = vmatpush1.msra.mxu0 0.0
    %1708 = vmatprep.subr.mxu0 0.0
    %1709 = vmatpush1.msra.mxu0 0.0
    %1710 = vmatprep.mubr.f32.mxu0 0.0
    %1711 = vmatmul.mubr.f32.gmra.mrb[0].mxu0 %v1638
    %v1712 = vpop.f32.mrb[0].mxu0
    %v1713 = vadd.f32 0.0, %v1712
    %v1714 = vpop.f32.mrb[0].mxu0
    %v1715 = vadd.f32 0.0, %v1714
    %1716 = vdwg.mxu0
    %1717 = vmatprep.subr.mxu0 %v516
    %1718 = vmatpush1.msra.mxu0 %v515
    %1719 = vmatprep.subr.mxu0 %v520
    %1720 = vmatpush1.msra.mxu0 %v519
    %1721 = vmatprep.subr.mxu0 %v524
    %1722 = vmatpush1.msra.mxu0 %v523
    %1723 = vmatprep.subr.mxu0 %v528
    %1724 = vmatpush1.msra.mxu0 %v527
    %1725 = vmatprep.subr.mxu0 %v532
    %1726 = vmatpush1.msra.mxu0 %v531
    %1727 = vmatprep.subr.mxu0 %v536
    %1728 = vmatpush1.msra.mxu0 %v535
    %1729 = vmatprep.subr.mxu0 %v540
    %1730 = vmatpush1.msra.mxu0 %v539
    %1731 = vmatprep.subr.mxu0 %v544
    %1732 = vmatpush1.msra.mxu0 %v543
    %1733 = vmatprep.subr.mxu0 %v548
    %1734 = vmatpush1.msra.mxu0 %v547
    %1735 = vmatprep.subr.mxu0 %v552
    %1736 = vmatpush1.msra.mxu0 %v551
    %1737 = vmatprep.subr.mxu0 %v556
    %1738 = vmatpush1.msra.mxu0 %v555
    %1739 = vmatprep.subr.mxu0 %v560
    %1740 = vmatpush1.msra.mxu0 %v559
    %1741 = vmatprep.subr.mxu0 %v564
    %1742 = vmatpush1.msra.mxu0 %v563
    %1743 = vmatprep.subr.mxu0 %v568
    %1744 = vmatpush1.msra.mxu0 %v567
    %1745 = vmatprep.subr.mxu0 %v572
    %1746 = vmatpush1.msra.mxu0 %v571
    %1747 = vmatprep.subr.mxu0 %v576
    %1748 = vmatpush1.msra.mxu0 %v575
    %1749 = vmatprep.subr.mxu0 0.0
    %1750 = vmatpush1.msra.mxu0 0.0
    %1751 = vmatprep.subr.mxu0 0.0
    %1752 = vmatpush1.msra.mxu0 0.0
    %1753 = vmatprep.subr.mxu0 0.0
    %1754 = vmatpush1.msra.mxu0 0.0
    %1755 = vmatprep.subr.mxu0 0.0
    %1756 = vmatpush1.msra.mxu0 0.0
    %1757 = vmatprep.subr.mxu0 0.0
    %1758 = vmatpush1.msra.mxu0 0.0
    %1759 = vmatprep.subr.mxu0 0.0
    %1760 = vmatpush1.msra.mxu0 0.0
    %1761 = vmatprep.subr.mxu0 0.0
    %1762 = vmatpush1.msra.mxu0 0.0
    %1763 = vmatprep.subr.mxu0 0.0
    %1764 = vmatpush1.msra.mxu0 0.0
    %1765 = vmatprep.subr.mxu0 0.0
    %1766 = vmatpush1.msra.mxu0 0.0
    %1767 = vmatprep.subr.mxu0 0.0
    %1768 = vmatpush1.msra.mxu0 0.0
    %1769 = vmatprep.subr.mxu0 0.0
    %1770 = vmatpush1.msra.mxu0 0.0
    %1771 = vmatprep.subr.mxu0 0.0
    %1772 = vmatpush1.msra.mxu0 0.0
    %1773 = vmatprep.subr.mxu0 0.0
    %1774 = vmatpush1.msra.mxu0 0.0
    %1775 = vmatprep.subr.mxu0 0.0
    %1776 = vmatpush1.msra.mxu0 0.0
    %1777 = vmatprep.subr.mxu0 0.0
    %1778 = vmatpush1.msra.mxu0 0.0
    %1779 = vmatprep.subr.mxu0 0.0
    %1780 = vmatpush1.msra.mxu0 0.0
    %1781 = vmatprep.mubr.f32.mxu0 0.0
    %1782 = vmatmul.mubr.f32.gmra.mrb[0].mxu0 %v1638
    %v1783 = vpop.f32.mrb[0].mxu0
    %v1784 = vadd.f32 0.0, %v1783
    %v1785 = vpop.f32.mrb[0].mxu0
    %v1786 = vadd.f32 0.0, %v1785
    %1787 = vdwg.mxu0
    %v1788 = vadd.f32 %v1642, %v1713
    %v1789 = vadd.f32 %v1643, %v1715
    %v1790 = vadd.f32 %v1644, %v1784
    %v1791 = vadd.f32 %v1645, %v1786
    %v1792 = vxor.u32 %v1788, 2147483648
    %v1793 = vmul.f32 %v1792, 1.442695
    %v1794 = vpow.pop %v1793
    %v1795 = vadd.f32 %v1794, 1.0
    %v1796 = vrcp.pop %v1795
    %v1797 = vmul.f32 1.0, %v1796
    %v1798 = vxor.u32 %v1789, 2147483648
    %v1799 = vmul.f32 %v1798, 1.442695
    %v1800 = vpow.pop %v1799
    %v1801 = vadd.f32 %v1800, 1.0
    %v1802 = vrcp.pop %v1801
    %v1803 = vmul.f32 1.0, %v1802
    %v1804 = vtanh.pop %v1790
    %v1805 = vxor.u32 %v1791, 2147483648
    %v1806 = vmul.f32 %v1805, 1.442695
    %v1807 = vpow.pop %v1806
    %v1808 = vadd.f32 %v1807, 1.0
    %v1809 = vrcp.pop %v1808
    %v1810 = vmul.f32 1.0, %v1809
    %v1811 = vmul.f32 %v1803, %v1636
    %v1812 = vmul.f32 %v1797, %v1804
    %v1813 = vadd.f32 %v1811, %v1812
    %v1814 = vtanh.pop %v1813
    %v1815 = vmul.f32 %v1810, %v1814
    %s1816 = smul.u32 7, 4
    %s1817 = smul.addr %s1816, 8
    %s1818 = scalar_lea.vmem [#allocation3], %s1817
    %v1819 = vld [vmem:[%s1818] sm:$0xff]
    %v1820 = vld [vmem:[%s1818 + $0x8] sm:$0xff]
    %v1821 = vld [vmem:[%s1818 + $0x10] sm:$0xff]
    %v1822 = vld [vmem:[%s1818 + $0x18] sm:$0xff]
    %1823 = vmatprep.subr.mxu0 %v514
    %1824 = vmatpush1.msra.mxu0 %v513
    %1825 = vmatprep.subr.mxu0 %v518
    %1826 = vmatpush1.msra.mxu0 %v517
    %1827 = vmatprep.subr.mxu0 %v522
    %1828 = vmatpush1.msra.mxu0 %v521
    %1829 = vmatprep.subr.mxu0 %v526
    %1830 = vmatpush1.msra.mxu0 %v525
    %1831 = vmatprep.subr.mxu0 %v530
    %1832 = vmatpush1.msra.mxu0 %v529
    %1833 = vmatprep.subr.mxu0 %v534
    %1834 = vmatpush1.msra.mxu0 %v533
    %1835 = vmatprep.subr.mxu0 %v538
    %1836 = vmatpush1.msra.mxu0 %v537
    %1837 = vmatprep.subr.mxu0 %v542
    %1838 = vmatpush1.msra.mxu0 %v541
    %1839 = vmatprep.subr.mxu0 %v546
    %1840 = vmatpush1.msra.mxu0 %v545
    %1841 = vmatprep.subr.mxu0 %v550
    %1842 = vmatpush1.msra.mxu0 %v549
    %1843 = vmatprep.subr.mxu0 %v554
    %1844 = vmatpush1.msra.mxu0 %v553
    %1845 = vmatprep.subr.mxu0 %v558
    %1846 = vmatpush1.msra.mxu0 %v557
    %1847 = vmatprep.subr.mxu0 %v562
    %1848 = vmatpush1.msra.mxu0 %v561
    %1849 = vmatprep.subr.mxu0 %v566
    %1850 = vmatpush1.msra.mxu0 %v565
    %1851 = vmatprep.subr.mxu0 %v570
    %1852 = vmatpush1.msra.mxu0 %v569
    %1853 = vmatprep.subr.mxu0 %v574
    %1854 = vmatpush1.msra.mxu0 %v573
    %1855 = vmatprep.subr.mxu0 0.0
    %1856 = vmatpush1.msra.mxu0 0.0
    %1857 = vmatprep.subr.mxu0 0.0
    %1858 = vmatpush1.msra.mxu0 0.0
    %1859 = vmatprep.subr.mxu0 0.0
    %1860 = vmatpush1.msra.mxu0 0.0
    %1861 = vmatprep.subr.mxu0 0.0
    %1862 = vmatpush1.msra.mxu0 0.0
    %1863 = vmatprep.subr.mxu0 0.0
    %1864 = vmatpush1.msra.mxu0 0.0
    %1865 = vmatprep.subr.mxu0 0.0
    %1866 = vmatpush1.msra.mxu0 0.0
    %1867 = vmatprep.subr.mxu0 0.0
    %1868 = vmatpush1.msra.mxu0 0.0
    %1869 = vmatprep.subr.mxu0 0.0
    %1870 = vmatpush1.msra.mxu0 0.0
    %1871 = vmatprep.subr.mxu0 0.0
    %1872 = vmatpush1.msra.mxu0 0.0
    %1873 = vmatprep.subr.mxu0 0.0
    %1874 = vmatpush1.msra.mxu0 0.0
    %1875 = vmatprep.subr.mxu0 0.0
    %1876 = vmatpush1.msra.mxu0 0.0
    %1877 = vmatprep.subr.mxu0 0.0
    %1878 = vmatpush1.msra.mxu0 0.0
    %1879 = vmatprep.subr.mxu0 0.0
    %1880 = vmatpush1.msra.mxu0 0.0
    %1881 = vmatprep.subr.mxu0 0.0
    %1882 = vmatpush1.msra.mxu0 0.0
    %1883 = vmatprep.subr.mxu0 0.0
    %1884 = vmatpush1.msra.mxu0 0.0
    %1885 = vmatprep.subr.mxu0 0.0
    %1886 = vmatpush1.msra.mxu0 0.0
    %1887 = vmatprep.mubr.f32.mxu0 0.0
    %1888 = vmatmul.mubr.f32.gmra.mrb[0].mxu0 %v1815
    %v1889 = vpop.f32.mrb[0].mxu0
    %v1890 = vadd.f32 0.0, %v1889
    %v1891 = vpop.f32.mrb[0].mxu0
    %v1892 = vadd.f32 0.0, %v1891
    %1893 = vdwg.mxu0
    %1894 = vmatprep.subr.mxu0 %v516
    %1895 = vmatpush1.msra.mxu0 %v515
    %1896 = vmatprep.subr.mxu0 %v520
    %1897 = vmatpush1.msra.mxu0 %v519
    %1898 = vmatprep.subr.mxu0 %v524
    %1899 = vmatpush1.msra.mxu0 %v523
    %1900 = vmatprep.subr.mxu0 %v528
    %1901 = vmatpush1.msra.mxu0 %v527
    %1902 = vmatprep.subr.mxu0 %v532
    %1903 = vmatpush1.msra.mxu0 %v531
    %1904 = vmatprep.subr.mxu0 %v536
    %1905 = vmatpush1.msra.mxu0 %v535
    %1906 = vmatprep.subr.mxu0 %v540
    %1907 = vmatpush1.msra.mxu0 %v539
    %1908 = vmatprep.subr.mxu0 %v544
    %1909 = vmatpush1.msra.mxu0 %v543
    %1910 = vmatprep.subr.mxu0 %v548
    %1911 = vmatpush1.msra.mxu0 %v547
    %1912 = vmatprep.subr.mxu0 %v552
    %1913 = vmatpush1.msra.mxu0 %v551
    %1914 = vmatprep.subr.mxu0 %v556
    %1915 = vmatpush1.msra.mxu0 %v555
    %1916 = vmatprep.subr.mxu0 %v560
    %1917 = vmatpush1.msra.mxu0 %v559
    %1918 = vmatprep.subr.mxu0 %v564
    %1919 = vmatpush1.msra.mxu0 %v563
    %1920 = vmatprep.subr.mxu0 %v568
    %1921 = vmatpush1.msra.mxu0 %v567
    %1922 = vmatprep.subr.mxu0 %v572
    %1923 = vmatpush1.msra.mxu0 %v571
    %1924 = vmatprep.subr.mxu0 %v576
    %1925 = vmatpush1.msra.mxu0 %v575
    %1926 = vmatprep.subr.mxu0 0.0
    %1927 = vmatpush1.msra.mxu0 0.0
    %1928 = vmatprep.subr.mxu0 0.0
    %1929 = vmatpush1.msra.mxu0 0.0
    %1930 = vmatprep.subr.mxu0 0.0
    %1931 = vmatpush1.msra.mxu0 0.0
    %1932 = vmatprep.subr.mxu0 0.0
    %1933 = vmatpush1.msra.mxu0 0.0
    %1934 = vmatprep.subr.mxu0 0.0
    %1935 = vmatpush1.msra.mxu0 0.0
    %1936 = vmatprep.subr.mxu0 0.0
    %1937 = vmatpush1.msra.mxu0 0.0
    %1938 = vmatprep.subr.mxu0 0.0
    %1939 = vmatpush1.msra.mxu0 0.0
    %1940 = vmatprep.subr.mxu0 0.0
    %1941 = vmatpush1.msra.mxu0 0.0
    %1942 = vmatprep.subr.mxu0 0.0
    %1943 = vmatpush1.msra.mxu0 0.0
    %1944 = vmatprep.subr.mxu0 0.0
    %1945 = vmatpush1.msra.mxu0 0.0
    %1946 = vmatprep.subr.mxu0 0.0
    %1947 = vmatpush1.msra.mxu0 0.0
    %1948 = vmatprep.subr.mxu0 0.0
    %1949 = vmatpush1.msra.mxu0 0.0
    %1950 = vmatprep.subr.mxu0 0.0
    %1951 = vmatpush1.msra.mxu0 0.0
    %1952 = vmatprep.subr.mxu0 0.0
    %1953 = vmatpush1.msra.mxu0 0.0
    %1954 = vmatprep.subr.mxu0 0.0
    %1955 = vmatpush1.msra.mxu0 0.0
    %1956 = vmatprep.subr.mxu0 0.0
    %1957 = vmatpush1.msra.mxu0 0.0
    %1958 = vmatprep.mubr.f32.mxu0 0.0
    %1959 = vmatmul.mubr.f32.gmra.mrb[0].mxu0 %v1815
    %v1960 = vpop.f32.mrb[0].mxu0
    %v1961 = vadd.f32 0.0, %v1960
    %v1962 = vpop.f32.mrb[0].mxu0
    %v1963 = vadd.f32 0.0, %v1962
    %1964 = vdwg.mxu0
    %v1965 = vadd.f32 %v1819, %v1890
    %v1966 = vadd.f32 %v1820, %v1892
    %v1967 = vadd.f32 %v1821, %v1961
    %v1968 = vadd.f32 %v1822, %v1963
    %v1969 = vxor.u32 %v1965, 2147483648
    %v1970 = vmul.f32 %v1969, 1.442695
    %v1971 = vpow.pop %v1970
    %v1972 = vadd.f32 %v1971, 1.0
    %v1973 = vrcp.pop %v1972
    %v1974 = vmul.f32 1.0, %v1973
    %v1975 = vxor.u32 %v1966, 2147483648
    %v1976 = vmul.f32 %v1975, 1.442695
    %v1977 = vpow.pop %v1976
    %v1978 = vadd.f32 %v1977, 1.0
    %v1979 = vrcp.pop %v1978
    %v1980 = vmul.f32 1.0, %v1979
    %v1981 = vtanh.pop %v1967
    %v1982 = vxor.u32 %v1968, 2147483648
    %v1983 = vmul.f32 %v1982, 1.442695
    %v1984 = vpow.pop %v1983
    %v1985 = vadd.f32 %v1984, 1.0
    %v1986 = vrcp.pop %v1985
    %v1987 = vmul.f32 1.0, %v1986
    %v1988 = vmul.f32 %v1980, %v1813
    %v1989 = vmul.f32 %v1974, %v1981
    %v1990 = vadd.f32 %v1988, %v1989
    %v1991 = vtanh.pop %v1990
    %v1992 = vmul.f32 %v1987, %v1991
    %v1993 = vld [vmem:[#allocation12] sm:$0xff]
    %v1994 = vld [vmem:[#allocation12 + $0x8] sm:$0xff]
    %v1995 = vld [vmem:[#allocation12 + $0x10] sm:$0xff]
    %v1996 = vld [vmem:[#allocation12 + $0x18] sm:$0xff]
    %v1997 = vld [vmem:[#allocation12 + $0x20] sm:$0xff]
    %v1998 = vld [vmem:[#allocation12 + $0x28] sm:$0xff]
    %v1999 = vld [vmem:[#allocation12 + $0x30] sm:$0xff]
    %v2000 = vld [vmem:[#allocation12 + $0x38] sm:$0xff]
    %v2001 = vld [vmem:[#allocation12 + $0x40] sm:$0xff]
    %v2002 = vld [vmem:[#allocation12 + $0x48] sm:$0xff]
    %v2003 = vld [vmem:[#allocation12 + $0x50] sm:$0xff]
    %v2004 = vld [vmem:[#allocation12 + $0x58] sm:$0xff]
    %v2005 = vld [vmem:[#allocation12 + $0x60] sm:$0xff]
    %v2006 = vld [vmem:[#allocation12 + $0x68] sm:$0xff]
    %v2007 = vld [vmem:[#allocation12 + $0x70] sm:$0xff]
    %v2008 = vld [vmem:[#allocation12 + $0x78] sm:$0xff]
    %v2009 = vld [vmem:[%s6] sm:$0x1]
    %v2011 = vlaneseq
    %v2012 = vshrl.u32 %v2011, 7
    %v2013 = vsub.s32 0, %v2012
    %v2014 = vrot.slane %v2009, %v2013
    %2016 = vmatprep.subr.mxu0 0.0
    %2017 = vmatpush1.msra.mxu0 %v1993
    %2018 = vmatprep.subr.mxu0 0.0
    %2019 = vmatpush1.msra.mxu0 %v1994
    %2020 = vmatprep.subr.mxu0 0.0
    %2021 = vmatpush1.msra.mxu0 %v1995
    %2022 = vmatprep.subr.mxu0 0.0
    %2023 = vmatpush1.msra.mxu0 %v1996
    %2024 = vmatprep.subr.mxu0 0.0
    %2025 = vmatpush1.msra.mxu0 %v1997
    %2026 = vmatprep.subr.mxu0 0.0
    %2027 = vmatpush1.msra.mxu0 %v1998
    %2028 = vmatprep.subr.mxu0 0.0
    %2029 = vmatpush1.msra.mxu0 %v1999
    %2030 = vmatprep.subr.mxu0 0.0
    %2031 = vmatpush1.msra.mxu0 %v2000
    %2032 = vmatprep.subr.mxu0 0.0
    %2033 = vmatpush1.msra.mxu0 %v2001
    %2034 = vmatprep.subr.mxu0 0.0
    %2035 = vmatpush1.msra.mxu0 %v2002
    %2036 = vmatprep.subr.mxu0 0.0
    %2037 = vmatpush1.msra.mxu0 %v2003
    %2038 = vmatprep.subr.mxu0 0.0
    %2039 = vmatpush1.msra.mxu0 %v2004
    %2040 = vmatprep.subr.mxu0 0.0
    %2041 = vmatpush1.msra.mxu0 %v2005
    %2042 = vmatprep.subr.mxu0 0.0
    %2043 = vmatpush1.msra.mxu0 %v2006
    %2044 = vmatprep.subr.mxu0 0.0
    %2045 = vmatpush1.msra.mxu0 %v2007
    %2046 = vmatprep.subr.mxu0 0.0
    %2047 = vmatpush1.msra.mxu0 %v2008
    %2048 = vmatprep.subr.mxu0 0.0
    %2049 = vmatpush1.msra.mxu0 0.0
    %2050 = vmatprep.subr.mxu0 0.0
    %2051 = vmatpush1.msra.mxu0 0.0
    %2052 = vmatprep.subr.mxu0 0.0
    %2053 = vmatpush1.msra.mxu0 0.0
    %2054 = vmatprep.subr.mxu0 0.0
    %2055 = vmatpush1.msra.mxu0 0.0
    %2056 = vmatprep.subr.mxu0 0.0
    %2057 = vmatpush1.msra.mxu0 0.0
    %2058 = vmatprep.subr.mxu0 0.0
    %2059 = vmatpush1.msra.mxu0 0.0
    %2060 = vmatprep.subr.mxu0 0.0
    %2061 = vmatpush1.msra.mxu0 0.0
    %2062 = vmatprep.subr.mxu0 0.0
    %2063 = vmatpush1.msra.mxu0 0.0
    %2064 = vmatprep.subr.mxu0 0.0
    %2065 = vmatpush1.msra.mxu0 0.0
    %2066 = vmatprep.subr.mxu0 0.0
    %2067 = vmatpush1.msra.mxu0 0.0
    %2068 = vmatprep.subr.mxu0 0.0
    %2069 = vmatpush1.msra.mxu0 0.0
    %2070 = vmatprep.subr.mxu0 0.0
    %2071 = vmatpush1.msra.mxu0 0.0
    %2072 = vmatprep.subr.mxu0 0.0
    %2073 = vmatpush1.msra.mxu0 0.0
    %2074 = vmatprep.subr.mxu0 0.0
    %2075 = vmatpush1.msra.mxu0 0.0
    %2076 = vmatprep.subr.mxu0 0.0
    %2077 = vmatpush1.msra.mxu0 0.0
    %2078 = vmatprep.subr.mxu0 0.0
    %2079 = vmatpush1.msra.mxu0 0.0
    %2080 = vmatprep.mubr.f32.mxu0 0.0
    %2081 = vmatmul.mubr.f32.gmra.mrb[0].mxu0 %v1992
    %v2082 = vpop.f32.mrb[0].mxu0
    %v2083 = vadd.f32 %v2014, %v2082
    %v2084 = vpop.f32.mrb[0].mxu0
    %2085 = vdwg.mxu0
    %2086 = vst [vmem:[#allocation14] sm:$0xff] %v2083
    // Predicated region
    $region49: #{tpu_custom_call.1} parent=1 // pred_check
      _
    $region50: #{tpu_custom_call.1} parent=1 // pred_check_branch
      %2088 = sbr.rel (0) target = $region52
    $region51: #{tpu_custom_call.1} parent=1 // pred_region
      %s2090 = ssub.s32 128, 128
      %2091 = vsyncadd [#allocation8], %s2090
      %s2093 = sshll.u32 [#allocation14], 4
      %s2094 = int_to_ptr.vmem [resolvable:$true] %s2093
      %2096 = dma.vmem_to_hbm [thread:$0]  %s2094, 128, %s7, [#allocation8]
    $region52: #{tpu_custom_call.1} parent=1 // pred_fallthru
      _
    // Predicated region
    $region53: #{tpu_custom_call.1} parent=1 // pred_check
      _
    $region54: #{tpu_custom_call.1} parent=1 // pred_check_branch
      %2098 = sbr.rel (0) target = $region56
    $region55: #{tpu_custom_call.1} parent=1 // pred_region
      %2099 = dma.done [#allocation8], 128
    $region56: #{tpu_custom_call.1} parent=1 // pred_fallthru
      _
    %2100 = vsyncpa [#allocation7], 1
    %2101 = vsyncpa [#allocation10], 1
    %2102 = vsyncpa [#allocation13], 1
    %2103 = vsyncpa [#allocation8], 1

</llo_original>
